<compile_context>
chip_gen: v7x
topology: tpu7x:2x2x1
jax: 0.10.0
libtpu: 0.0.40
codegen_flags: <defaults>
</compile_context>

<pallas_src>
import functools

import jax
import jax.numpy as jnp
from jax import lax
from jax.experimental import pallas as pl
from jax.experimental.pallas import tpu as pltpu

EPS = 1e-6
TAU = 100.0

# Block-size policy (see review): keep per-step logits tiles around
# (a_blk*T, b_blk*V) <= (512, 256) and the per-step group counts <= 16.
MT_TARGET = 512      # target rows of the per-step logits tile (a_blk * T)
NV_TARGET = 256      # target cols of the per-step logits tile (b_blk * V)
GROUP_CAP = 16       # max groups per step for the masked group-max loops


def _l2norm(x, eps=EPS):
    # norm(a) = a / max(||a||, eps)   (wrapper-side, matches the reference)
    n = jnp.linalg.norm(x, axis=-1, keepdims=True)
    return x / jnp.maximum(n, eps)


def _lane_group_max(x, n_groups, width):
    """Per-row max within contiguous lane groups of `width`, broadcast wide.

    One masked full-width reduction per group; the wrapper keeps the per-step
    group count small (<= GROUP_CAP) via B-blocking.  The lane iota is built
    once, outside the loop, and the loop is only unrolled for small counts.
    """
    if n_groups == 1:
        return jnp.max(x, axis=-1, keepdims=True)
    neg = jnp.float32(-jnp.inf)
    lane = lax.broadcasted_iota(jnp.int32, x.shape, x.ndim - 1)   # hoisted

    def body(g, acc):
        sel = (lane >= g * width) & (lane < (g + 1) * width)
        m = jnp.max(jnp.where(sel, x, neg), axis=-1, keepdims=True)
        return jnp.where(sel, m, acc)

    return lax.fori_loop(0, n_groups, body, jnp.full_like(x, neg),
                         unroll=n_groups <= 8)


def _row_group_max(x, n_groups, height):
    """Per-column max within contiguous row groups of `height`, broadcast wide."""
    if n_groups == 1:
        return jnp.max(x, axis=0, keepdims=True)
    neg = jnp.float32(-jnp.inf)
    row = lax.broadcasted_iota(jnp.int32, x.shape, 0)              # hoisted

    def body(g, acc):
        sel = (row >= g * height) & (row < (g + 1) * height)
        m = jnp.max(jnp.where(sel, x, neg), axis=0, keepdims=True)
        return jnp.where(sel, m, acc)

    return lax.fori_loop(0, n_groups, body, jnp.full_like(x, neg),
                         unroll=n_groups <= 8)


def _drl_wwti33_kernel(t_ref, vT_ref, gc_ref, grt_ref, o_ref, *,
                       a_blk, b_blk, T, V, tau):
    """One grid step: a_blk text samples x b_blk videos.

    t_ref  : (a_blk*T, D)  normalized, mask-applied text tokens       (VMEM)
    vT_ref : (D, b_blk*V)  normalized video frames, pre-transposed    (VMEM)
    gc_ref : (b_blk*V, b_blk)  0/1: frame column -> its video         (VMEM, grid-invariant)
    grt_ref: (a_blk, a_blk*T)  0/1: token row -> its text sample      (VMEM, grid-invariant)
    o_ref  : (a_blk, b_blk)    retrieval logits for this block        (VMEM)
    """
    f32 = jnp.float32
    neg = f32(-jnp.inf)

    tn = t_ref[...]
    vT = vT_ref[...]
    gc = gc_ref[...]
    grt = grt_ref[...]

    # ---- single fused MXU similarity matmul, standard (M,K)x(K,N) orientation
    S = jnp.dot(tn, vT, preferred_element_type=f32)            # (Mt, Nv)

    # ---- stage 1, t2v: softmax over frames v within each video group ----
    mx = _lane_group_max(S, b_blk, V)
    e = jnp.exp((S - mx) * tau)
    den = jnp.dot(e, gc, preferred_element_type=f32)           # (Mt, b_blk)
    num = jnp.dot(S * e, gc, preferred_element_type=f32)       # (Mt, b_blk)
    t2v = num / den        # exact divide: stage-1 errors are amplified by tau in stage 2

    # ---- stage 1, v2t: softmax over tokens t within each text sample (0 -> -inf)
    Sm = jnp.where(S == 0.0, neg, S)
    mxr = _row_group_max(Sm, a_blk, T)
    er = jnp.exp((Sm - mxr) * tau)
    denr = jnp.dot(grt, er, preferred_element_type=f32)        # (a_blk, Nv)
    numr = jnp.dot(grt, S * er, preferred_element_type=f32)    # (a_blk, Nv)
    v2t = numr / denr      # exact divide (stage 1)

    # ---- stage 2, t2v: softmax over tokens t (0 -> -inf) ----
    t2v_m = jnp.where(t2v == 0.0, neg, t2v)
    mx2 = _row_group_max(t2v_m, a_blk, T)
    e2 = jnp.exp((t2v_m - mx2) * tau)
    den2 = jnp.dot(grt, e2, preferred_element_type=f32)        # (a_blk, b_blk)
    num2 = jnp.dot(grt, t2v * e2, preferred_element_type=f32)  # (a_blk, b_blk)
    t2v_f = num2 * pl.reciprocal(den2, approx=True)            # approx OK in stage 2

    # ---- stage 2, v2t: softmax over frames v (no -inf fill, per the reference)
    mx3 = _lane_group_max(v2t, b_blk, V)
    e3 = jnp.exp((v2t - mx3) * tau)
    den3 = jnp.dot(e3, gc, preferred_element_type=f32)         # (a_blk, b_blk)
    num3 = jnp.dot(v2t * e3, gc, preferred_element_type=f32)   # (a_blk, b_blk)
    v2t_f = num3 * pl.reciprocal(den3, approx=True)

    o_ref[...] = 0.5 * (t2v_f + v2t_f)


def _choose_block(total, per, target, cap):
    """Largest divisor of `total` not exceeding min(cap, target // per)."""
    limit = max(1, min(cap, max(1, target // per), total))
    for d in range(limit, 0, -1):
        if total % d == 0:
            return d
    return 1


def drl_head_wwti33(text_feat, video_feat, text_mask, *,
                    a_block=None, b_block=None,
                    matmul_dtype=jnp.float32, tau=TAU, eps=EPS):
    """DRL_head(mode='wwti33').forward(text_feat, video_feat, text_mask) (eval).

    matmul_dtype: set to jnp.bfloat16 on v6e/v7x to feed bf16 operands to the
    similarity matmul (f32 accumulation); masked rows stay exactly zero so the
    `== 0` sentinel survives.  Default keeps f32 for bit-tight accuracy.
    """
    A, T0, D = text_feat.shape
    B, V, Dv = video_feat.shape
    assert D == Dv, (D, Dv)

    text_feat = text_feat.astype(jnp.float32)
    video_feat = video_feat.astype(jnp.float32)
    text_mask = text_mask.astype(jnp.float32)

    # Pad tokens to a multiple of 8 (sublane tile).  Padded tokens carry
    # mask = 0, which the wwti33 math already treats as "absent" via the == 0
    # sentinel, so this is exact.
    T = ((T0 + 7) // 8) * 8
    if T != T0:
        text_feat = jnp.pad(text_feat, ((0, 0), (0, T - T0), (0, 0)))
        text_mask = jnp.pad(text_mask, ((0, 0), (0, T - T0)))

    # ---- hoisted preprocessing (review): norms, mask, video transpose ----
    tn = _l2norm(text_feat, eps) * text_mask[..., None]            # (A, T, D)
    vn = _l2norm(video_feat, eps)                                  # (B, V, D)

    # ---- block sizes ----
    if a_block is None:
        a_block = _choose_block(A, T, MT_TARGET, GROUP_CAP)
    if b_block is None:
        b_block = _choose_block(B, V, NV_TARGET, GROUP_CAP)
    if A % a_block or B % b_block:
        raise ValueError(f"block sizes must divide the batch dims: "
                         f"A={A}, a_block={a_block}, B={B}, b_block={b_block}")
    n_i, n_j = A // a_block, B // b_block
    Mt, Nv = a_block * T, b_block * V

    # ---- operands (wrapper-side reshapes are free XLA layout plumbing) ----
    t2d = tn.reshape(A * T, D).astype(matmul_dtype)                          # (A*T, D)
    v3d = (vn.reshape(n_j, b_block, V, D).transpose(0, 3, 1, 2)
             .reshape(n_j, D, Nv).astype(matmul_dtype))                      # (n_j, D, Nv)

    # Grid-invariant 0/1 indicator matrices (hoisted out of the kernel).
    # They are tiny, so single- vs double-buffering them is immaterial; the big
    # video operand is now blocked per grid step, so the previous
    # "single-buffer the grid-invariant video" item no longer applies.
    col = jnp.arange(Nv, dtype=jnp.int32)
    gc = (col[:, None] // V ==
          jnp.arange(b_block, dtype=jnp.int32)[None, :]).astype(jnp.float32)  # (Nv, b_blk)
    row = jnp.arange(Mt, dtype=jnp.int32)
    grt = (jnp.arange(a_block, dtype=jnp.int32)[:, None] ==
           row[None, :] // T).astype(jnp.float32)                             # (a_blk, Mt)

    kernel = functools.partial(_drl_wwti33_kernel, a_blk=a_block, b_blk=b_block,
                               T=T, V=V, tau=float(tau))

    # ---- VMEM budget (review): derive the limit from the chosen block sizes.
    item = jnp.dtype(matmul_dtype).itemsize
    bufs = (2 * (Mt * D + D * Nv) * item
            + (Nv * b_block + a_block * Mt + 2 * a_block * b_block) * 4)
    temps = (8 * Mt * Nv + 6 * Mt * b_block + 6 * a_block * Nv) * 4
    vmem_limit = int(min(100 * 2 ** 20, max(32 * 2 ** 20, (bufs + temps) * 3 // 2)))

    out4 = pl.pallas_call(
        kernel,
        out_shape=jax.ShapeDtypeStruct((n_i, n_j, a_block, b_block), jnp.float32),
        grid_spec=pltpu.PrefetchScalarGridSpec(
            num_scalar_prefetch=0,
            grid=(n_i, n_j),
            in_specs=[
                pl.BlockSpec((Mt, D), lambda i, j: (i, 0)),
                pl.BlockSpec((None, D, Nv), lambda i, j: (j, 0, 0)),
                pl.BlockSpec((Nv, b_block), lambda i, j: (0, 0)),     # grid-invariant
                pl.BlockSpec((a_block, Mt), lambda i, j: (0, 0)),     # grid-invariant
            ],
            out_specs=pl.BlockSpec((None, None, a_block, b_block),
                                   lambda i, j: (i, j, 0, 0)),
        ),
        compiler_params=pltpu.CompilerParams(
            dimension_semantics=("parallel", "parallel"),
            vmem_limit_bytes=vmem_limit),
    )(t2d, v3d, gc, grt)

    return out4.transpose(0, 2, 1, 3).reshape(A, B)                  # (A, B)


def _reference(text_feat, video_feat, text_mask, tau=TAU, eps=EPS):
    """Plain-JAX transcription of the PyTorch wwti33 branch (for checking)."""
    def l2n(a):
        n = jnp.linalg.norm(a, axis=-1, keepdims=True)
        return a / jnp.maximum(n, eps)

    t = l2n(text_feat)
    v = l2n(video_feat)
    logits = jnp.einsum('atd,bvd->abtv', t, v)
    logits = jnp.einsum('abtv,at->abtv', logits, text_mask)
    neg = -jnp.inf

    sm_v1 = jax.nn.softmax(logits * tau, axis=-1)
    t2v = jnp.sum(logits * sm_v1, axis=-1)                            # (a,b,t)
    sm_t1 = jax.nn.softmax(jnp.where(logits == 0, neg, logits) * tau, axis=-2)
    v2t = jnp.sum(logits * sm_t1, axis=-2)                            # (a,b,v)

    sm_t2 = jax.nn.softmax(jnp.where(t2v == 0, neg, t2v) * tau, axis=-1)
    t2v = jnp.sum(t2v * sm_t2, axis=2)                                # (a,b)
    sm_v2 = jax.nn.softmax(v2t * tau, axis=-1)
    v2t = jnp.sum(v2t * sm_v2, axis=2)                                # (a,b)
    return 0.5 * (t2v + v2t)


if __name__ == "__main__":
    key = jax.random.PRNGKey(0)
    k1, k2, k3, k4, k5, k6 = jax.random.split(key, 6)

    # --- Config 1: exercises the 2-D blocked grid (2 x 2 grid steps). ---
    A, T, D = 8, 8, 64
    B, V = 8, 8
    text_feat = jax.random.normal(k1, (A, T, D), dtype=jnp.float32)
    video_feat = jax.random.normal(k2, (B, V, D), dtype=jnp.float32)
    lengths = jax.random.randint(k3, (A,), 1, T + 1)
    text_mask = (jnp.arange(T)[None, :] < lengths[:, None]).astype(jnp.float32)

    out = drl_head_wwti33(text_feat, video_feat, text_mask, a_block=4, b_block=4)
    out = jax.block_until_ready(out)
    ref = _reference(text_feat, video_feat, text_mask)
    assert out.shape == (A, B), out.shape
    # Stage-1 divides are exact; the only approximation left is the stage-2
    # EUP reciprocal (applied after all tau-amplified exponents).
    assert jnp.allclose(out, ref, atol=5e-3, rtol=5e-3), (out, ref)

    # --- Config 2: default block heuristics + token-count padding (T % 8 != 0). ---
    A2, T2, D2, B2, V2 = 6, 7, 32, 4, 8
    text_feat2 = jax.random.normal(k4, (A2, T2, D2), dtype=jnp.float32)
    video_feat2 = jax.random.normal(k5, (B2, V2, D2), dtype=jnp.float32)
    lengths2 = jax.random.randint(k6, (A2,), 1, T2 + 1)
    text_mask2 = (jnp.arange(T2)[None, :] < lengths2[:, None]).astype(jnp.float32)

    out2 = drl_head_wwti33(text_feat2, video_feat2, text_mask2)
    out2 = jax.block_until_ready(out2)
    ref2 = _reference(text_feat2, video_feat2, text_mask2)
    assert out2.shape == (A2, B2), out2.shape
    assert jnp.allclose(out2, ref2, atol=5e-3, rtol=5e-3), (out2, ref2)

    # NOTE: fully-masked text samples produce NaN in both this kernel and the
    # PyTorch reference (softmax over an all -inf row); production inputs with
    # empty captions would need an explicit guard.
    # TODO(synk): training-time distributed all_gather (cross-device retrieval)
    # and the other mode branches ('wti', 'ti', 'CSRA1_*', 'refine*', ...) are
    # not exercised by the default config and are not implemented here.
    print("KERNEL_OK")
</pallas_src>

<mosaic_0001>
module attributes {stable_mosaic.version = 11 : i64} {
  func.func @_drl_wwti33_kernel(%arg0: i32, %arg1: i32, %arg2: memref<32x64xf32, #tpu.memory_space<vmem>>, %arg3: memref<1x64x32xf32, #tpu.memory_space<vmem>>, %arg4: memref<32x4xf32, #tpu.memory_space<vmem>>, %arg5: memref<4x32xf32, #tpu.memory_space<vmem>>, %arg6: memref<1x1x4x4xf32, #tpu.memory_space<vmem>>) attributes {dimension_semantics = [#tpu.dimension_semantics<parallel>, #tpu.dimension_semantics<parallel>], iteration_bounds = array<i64: 2, 2>, scalar_prefetch = 0 : i64, scratch_operands = 0 : i64, tpu.core_type = #tpu.core_type<tc>, window_params = [{transform_indices = @transform_0, window_bounds = array<i64: 32, 64>}, {transform_indices = @transform_1, window_bounds = array<i64: 1, 64, 32>}, {pipeline_mode = #tpu.pipeline_mode<synchronous>, transform_indices = @transform_2, window_bounds = array<i64: 32, 4>}, {pipeline_mode = #tpu.pipeline_mode<synchronous>, transform_indices = @transform_3, window_bounds = array<i64: 4, 32>}, {transform_indices = @transform_4, window_bounds = array<i64: 1, 1, 4, 4>}]} {
    %c0 = arith.constant 0 : index
    %c0_0 = arith.constant 0 : index
    %0 = vector.load %arg2[%c0, %c0_0] : memref<32x64xf32, #tpu.memory_space<vmem>>, vector<32x64xf32>
    %c0_1 = arith.constant 0 : index
    %c0_2 = arith.constant 0 : index
    %c0_3 = arith.constant 0 : index
    %1 = vector.load %arg3[%c0_1, %c0_2, %c0_3] : memref<1x64x32xf32, #tpu.memory_space<vmem>>, vector<1x64x32xf32>
    %2 = vector.shape_cast %1 : vector<1x64x32xf32> to vector<64x32xf32>
    %c0_4 = arith.constant 0 : index
    %c0_5 = arith.constant 0 : index
    %3 = vector.load %arg4[%c0_4, %c0_5] : memref<32x4xf32, #tpu.memory_space<vmem>>, vector<32x4xf32>
    %c0_6 = arith.constant 0 : index
    %c0_7 = arith.constant 0 : index
    %4 = vector.load %arg5[%c0_6, %c0_7] : memref<4x32xf32, #tpu.memory_space<vmem>>, vector<4x32xf32>
    %cst = arith.constant dense<0.000000e+00> : vector<32x32xf32>
    %5 = tpu.matmul %0, %2, %cst {dimension_numbers = #tpu.dot_dimension_numbers<[1], [0], [0], [1], [0, 0, 1, 1], [], []>} : vector<32x64xf32>, vector<64x32xf32>, vector<32x32xf32> -> vector<32x32xf32>
    %6 = tpu.iota {dimensions = array<i32: 1>} : vector<32x32xi32>
    %cst_8 = arith.constant 0xFF800000 : f32
    %7 = vector.broadcast %cst_8 : f32 to vector<32x32xf32>
    %cst_9 = arith.constant 0xFF800000 : f32
    %c0_i32 = arith.constant 0 : i32
    %c8_i32 = arith.constant 8 : i32
    %8 = arith.muli %c0_i32, %c8_i32 : i32
    %9 = vector.broadcast %8 : i32 to vector<32x32xi32>
    %10 = arith.cmpi sge, %6, %9 : vector<32x32xi32>
    %c1_i32 = arith.constant 1 : i32
    %11 = arith.addi %c0_i32, %c1_i32 : i32
    %c8_i32_10 = arith.constant 8 : i32
    %12 = arith.muli %11, %c8_i32_10 : i32
    %13 = vector.broadcast %12 : i32 to vector<32x32xi32>
    %14 = arith.cmpi slt, %6, %13 : vector<32x32xi32>
    %15 = arith.andi %10, %14 : vector<32x32xi1>
    %16 = vector.broadcast %cst_9 : f32 to vector<32x32xf32>
    %17 = arith.select %15, %5, %16 : vector<32x32xi1>, vector<32x32xf32>
    %cst_11 = arith.constant dense<0xFF800000> : vector<32xf32>
    %18 = vector.multi_reduction <maximumf>, %17, %cst_11 [1] : vector<32x32xf32> to vector<32xf32>
    %19 = vector.shape_cast %18 : vector<32xf32> to vector<32x1xf32>
    %20 = vector.shape_cast %19 : vector<32x1xf32> to vector<32x1xf32>
    %21 = vector.broadcast %20 : vector<32x1xf32> to vector<32x32xf32>
    %22 = arith.select %15, %21, %7 : vector<32x32xi1>, vector<32x32xf32>
    %c1_i32_12 = arith.constant 1 : i32
    %c8_i32_13 = arith.constant 8 : i32
    %23 = arith.muli %c1_i32_12, %c8_i32_13 : i32
    %24 = vector.broadcast %23 : i32 to vector<32x32xi32>
    %25 = arith.cmpi sge, %6, %24 : vector<32x32xi32>
    %c1_i32_14 = arith.constant 1 : i32
    %26 = arith.addi %c1_i32_12, %c1_i32_14 : i32
    %c8_i32_15 = arith.constant 8 : i32
    %27 = arith.muli %26, %c8_i32_15 : i32
    %28 = vector.broadcast %27 : i32 to vector<32x32xi32>
    %29 = arith.cmpi slt, %6, %28 : vector<32x32xi32>
    %30 = arith.andi %25, %29 : vector<32x32xi1>
    %31 = vector.broadcast %cst_9 : f32 to vector<32x32xf32>
    %32 = arith.select %30, %5, %31 : vector<32x32xi1>, vector<32x32xf32>
    %cst_16 = arith.constant dense<0xFF800000> : vector<32xf32>
    %33 = vector.multi_reduction <maximumf>, %32, %cst_16 [1] : vector<32x32xf32> to vector<32xf32>
    %34 = vector.shape_cast %33 : vector<32xf32> to vector<32x1xf32>
    %35 = vector.shape_cast %34 : vector<32x1xf32> to vector<32x1xf32>
    %36 = vector.broadcast %35 : vector<32x1xf32> to vector<32x32xf32>
    %37 = arith.select %30, %36, %22 : vector<32x32xi1>, vector<32x32xf32>
    %c2_i32 = arith.constant 2 : i32
    %c8_i32_17 = arith.constant 8 : i32
    %38 = arith.muli %c2_i32, %c8_i32_17 : i32
    %39 = vector.broadcast %38 : i32 to vector<32x32xi32>
    %40 = arith.cmpi sge, %6, %39 : vector<32x32xi32>
    %c1_i32_18 = arith.constant 1 : i32
    %41 = arith.addi %c2_i32, %c1_i32_18 : i32
    %c8_i32_19 = arith.constant 8 : i32
    %42 = arith.muli %41, %c8_i32_19 : i32
    %43 = vector.broadcast %42 : i32 to vector<32x32xi32>
    %44 = arith.cmpi slt, %6, %43 : vector<32x32xi32>
    %45 = arith.andi %40, %44 : vector<32x32xi1>
    %46 = vector.broadcast %cst_9 : f32 to vector<32x32xf32>
    %47 = arith.select %45, %5, %46 : vector<32x32xi1>, vector<32x32xf32>
    %cst_20 = arith.constant dense<0xFF800000> : vector<32xf32>
    %48 = vector.multi_reduction <maximumf>, %47, %cst_20 [1] : vector<32x32xf32> to vector<32xf32>
    %49 = vector.shape_cast %48 : vector<32xf32> to vector<32x1xf32>
    %50 = vector.shape_cast %49 : vector<32x1xf32> to vector<32x1xf32>
    %51 = vector.broadcast %50 : vector<32x1xf32> to vector<32x32xf32>
    %52 = arith.select %45, %51, %37 : vector<32x32xi1>, vector<32x32xf32>
    %c3_i32 = arith.constant 3 : i32
    %c8_i32_21 = arith.constant 8 : i32
    %53 = arith.muli %c3_i32, %c8_i32_21 : i32
    %54 = vector.broadcast %53 : i32 to vector<32x32xi32>
    %55 = arith.cmpi sge, %6, %54 : vector<32x32xi32>
    %c1_i32_22 = arith.constant 1 : i32
    %56 = arith.addi %c3_i32, %c1_i32_22 : i32
    %c8_i32_23 = arith.constant 8 : i32
    %57 = arith.muli %56, %c8_i32_23 : i32
    %58 = vector.broadcast %57 : i32 to vector<32x32xi32>
    %59 = arith.cmpi slt, %6, %58 : vector<32x32xi32>
    %60 = arith.andi %55, %59 : vector<32x32xi1>
    %61 = vector.broadcast %cst_9 : f32 to vector<32x32xf32>
    %62 = arith.select %60, %5, %61 : vector<32x32xi1>, vector<32x32xf32>
    %cst_24 = arith.constant dense<0xFF800000> : vector<32xf32>
    %63 = vector.multi_reduction <maximumf>, %62, %cst_24 [1] : vector<32x32xf32> to vector<32xf32>
    %64 = vector.shape_cast %63 : vector<32xf32> to vector<32x1xf32>
    %65 = vector.shape_cast %64 : vector<32x1xf32> to vector<32x1xf32>
    %66 = vector.broadcast %65 : vector<32x1xf32> to vector<32x32xf32>
    %67 = arith.select %60, %66, %52 : vector<32x32xi1>, vector<32x32xf32>
    %c4_i32 = arith.constant 4 : i32
    %68 = arith.subf %5, %67 : vector<32x32xf32>
    %cst_25 = arith.constant 1.000000e+02 : f32
    %69 = vector.broadcast %cst_25 : f32 to vector<32x32xf32>
    %70 = arith.mulf %68, %69 : vector<32x32xf32>
    %71 = math.exp %70 : vector<32x32xf32>
    %cst_26 = arith.constant dense<0.000000e+00> : vector<32x4xf32>
    %72 = tpu.matmul %71, %3, %cst_26 {dimension_numbers = #tpu.dot_dimension_numbers<[1], [0], [0], [1], [0, 0, 1, 1], [], []>} : vector<32x32xf32>, vector<32x4xf32>, vector<32x4xf32> -> vector<32x4xf32>
    %73 = arith.mulf %5, %71 : vector<32x32xf32>
    %cst_27 = arith.constant dense<0.000000e+00> : vector<32x4xf32>
    %74 = tpu.matmul %73, %3, %cst_27 {dimension_numbers = #tpu.dot_dimension_numbers<[1], [0], [0], [1], [0, 0, 1, 1], [], []>} : vector<32x32xf32>, vector<32x4xf32>, vector<32x4xf32> -> vector<32x4xf32>
    %75 = arith.divf %74, %72 : vector<32x4xf32>
    %cst_28 = arith.constant 0.000000e+00 : f32
    %76 = vector.broadcast %cst_28 : f32 to vector<32x32xf32>
    %77 = arith.cmpf oeq, %5, %76 : vector<32x32xf32>
    %cst_29 = arith.constant 0xFF800000 : f32
    %78 = vector.broadcast %cst_29 : f32 to vector<32x32xf32>
    %79 = arith.select %77, %78, %5 : vector<32x32xi1>, vector<32x32xf32>
    %80 = tpu.iota {dimensions = array<i32: 0>} : vector<32x32xi32>
    %cst_30 = arith.constant 0xFF800000 : f32
    %81 = vector.broadcast %cst_30 : f32 to vector<32x32xf32>
    %cst_31 = arith.constant 0xFF800000 : f32
    %c0_i32_32 = arith.constant 0 : i32
    %c8_i32_33 = arith.constant 8 : i32
    %82 = arith.muli %c0_i32_32, %c8_i32_33 : i32
    %83 = vector.broadcast %82 : i32 to vector<32x32xi32>
    %84 = arith.cmpi sge, %80, %83 : vector<32x32xi32>
    %c1_i32_34 = arith.constant 1 : i32
    %85 = arith.addi %c0_i32_32, %c1_i32_34 : i32
    %c8_i32_35 = arith.constant 8 : i32
    %86 = arith.muli %85, %c8_i32_35 : i32
    %87 = vector.broadcast %86 : i32 to vector<32x32xi32>
    %88 = arith.cmpi slt, %80, %87 : vector<32x32xi32>
    %89 = arith.andi %84, %88 : vector<32x32xi1>
    %90 = vector.broadcast %cst_31 : f32 to vector<32x32xf32>
    %91 = arith.select %89, %79, %90 : vector<32x32xi1>, vector<32x32xf32>
    %cst_36 = arith.constant dense<0xFF800000> : vector<32xf32>
    %92 = vector.multi_reduction <maximumf>, %91, %cst_36 [0] : vector<32x32xf32> to vector<32xf32>
    %93 = vector.shape_cast %92 : vector<32xf32> to vector<1x32xf32>
    %94 = vector.shape_cast %93 : vector<1x32xf32> to vector<1x32xf32>
    %95 = vector.broadcast %94 : vector<1x32xf32> to vector<32x32xf32>
    %96 = arith.select %89, %95, %81 : vector<32x32xi1>, vector<32x32xf32>
    %c1_i32_37 = arith.constant 1 : i32
    %c8_i32_38 = arith.constant 8 : i32
    %97 = arith.muli %c1_i32_37, %c8_i32_38 : i32
    %98 = vector.broadcast %97 : i32 to vector<32x32xi32>
    %99 = arith.cmpi sge, %80, %98 : vector<32x32xi32>
    %c1_i32_39 = arith.constant 1 : i32
    %100 = arith.addi %c1_i32_37, %c1_i32_39 : i32
    %c8_i32_40 = arith.constant 8 : i32
    %101 = arith.muli %100, %c8_i32_40 : i32
    %102 = vector.broadcast %101 : i32 to vector<32x32xi32>
    %103 = arith.cmpi slt, %80, %102 : vector<32x32xi32>
    %104 = arith.andi %99, %103 : vector<32x32xi1>
    %105 = vector.broadcast %cst_31 : f32 to vector<32x32xf32>
    %106 = arith.select %104, %79, %105 : vector<32x32xi1>, vector<32x32xf32>
    %cst_41 = arith.constant dense<0xFF800000> : vector<32xf32>
    %107 = vector.multi_reduction <maximumf>, %106, %cst_41 [0] : vector<32x32xf32> to vector<32xf32>
    %108 = vector.shape_cast %107 : vector<32xf32> to vector<1x32xf32>
    %109 = vector.shape_cast %108 : vector<1x32xf32> to vector<1x32xf32>
    %110 = vector.broadcast %109 : vector<1x32xf32> to vector<32x32xf32>
    %111 = arith.select %104, %110, %96 : vector<32x32xi1>, vector<32x32xf32>
    %c2_i32_42 = arith.constant 2 : i32
    %c8_i32_43 = arith.constant 8 : i32
    %112 = arith.muli %c2_i32_42, %c8_i32_43 : i32
    %113 = vector.broadcast %112 : i32 to vector<32x32xi32>
    %114 = arith.cmpi sge, %80, %113 : vector<32x32xi32>
    %c1_i32_44 = arith.constant 1 : i32
    %115 = arith.addi %c2_i32_42, %c1_i32_44 : i32
    %c8_i32_45 = arith.constant 8 : i32
    %116 = arith.muli %115, %c8_i32_45 : i32
    %117 = vector.broadcast %116 : i32 to vector<32x32xi32>
    %118 = arith.cmpi slt, %80, %117 : vector<32x32xi32>
    %119 = arith.andi %114, %118 : vector<32x32xi1>
    %120 = vector.broadcast %cst_31 : f32 to vector<32x32xf32>
    %121 = arith.select %119, %79, %120 : vector<32x32xi1>, vector<32x32xf32>
    %cst_46 = arith.constant dense<0xFF800000> : vector<32xf32>
    %122 = vector.multi_reduction <maximumf>, %121, %cst_46 [0] : vector<32x32xf32> to vector<32xf32>
    %123 = vector.shape_cast %122 : vector<32xf32> to vector<1x32xf32>
    %124 = vector.shape_cast %123 : vector<1x32xf32> to vector<1x32xf32>
    %125 = vector.broadcast %124 : vector<1x32xf32> to vector<32x32xf32>
    %126 = arith.select %119, %125, %111 : vector<32x32xi1>, vector<32x32xf32>
    %c3_i32_47 = arith.constant 3 : i32
    %c8_i32_48 = arith.constant 8 : i32
    %127 = arith.muli %c3_i32_47, %c8_i32_48 : i32
    %128 = vector.broadcast %127 : i32 to vector<32x32xi32>
    %129 = arith.cmpi sge, %80, %128 : vector<32x32xi32>
    %c1_i32_49 = arith.constant 1 : i32
    %130 = arith.addi %c3_i32_47, %c1_i32_49 : i32
    %c8_i32_50 = arith.constant 8 : i32
    %131 = arith.muli %130, %c8_i32_50 : i32
    %132 = vector.broadcast %131 : i32 to vector<32x32xi32>
    %133 = arith.cmpi slt, %80, %132 : vector<32x32xi32>
    %134 = arith.andi %129, %133 : vector<32x32xi1>
    %135 = vector.broadcast %cst_31 : f32 to vector<32x32xf32>
    %136 = arith.select %134, %79, %135 : vector<32x32xi1>, vector<32x32xf32>
    %cst_51 = arith.constant dense<0xFF800000> : vector<32xf32>
    %137 = vector.multi_reduction <maximumf>, %136, %cst_51 [0] : vector<32x32xf32> to vector<32xf32>
    %138 = vector.shape_cast %137 : vector<32xf32> to vector<1x32xf32>
    %139 = vector.shape_cast %138 : vector<1x32xf32> to vector<1x32xf32>
    %140 = vector.broadcast %139 : vector<1x32xf32> to vector<32x32xf32>
    %141 = arith.select %134, %140, %126 : vector<32x32xi1>, vector<32x32xf32>
    %c4_i32_52 = arith.constant 4 : i32
    %142 = arith.subf %79, %141 : vector<32x32xf32>
    %cst_53 = arith.constant 1.000000e+02 : f32
    %143 = vector.broadcast %cst_53 : f32 to vector<32x32xf32>
    %144 = arith.mulf %142, %143 : vector<32x32xf32>
    %145 = math.exp %144 : vector<32x32xf32>
    %cst_54 = arith.constant dense<0.000000e+00> : vector<4x32xf32>
    %146 = tpu.matmul %4, %145, %cst_54 {dimension_numbers = #tpu.dot_dimension_numbers<[1], [0], [0], [1], [0, 0, 1, 1], [], []>} : vector<4x32xf32>, vector<32x32xf32>, vector<4x32xf32> -> vector<4x32xf32>
    %147 = arith.mulf %5, %145 : vector<32x32xf32>
    %cst_55 = arith.constant dense<0.000000e+00> : vector<4x32xf32>
    %148 = tpu.matmul %4, %147, %cst_55 {dimension_numbers = #tpu.dot_dimension_numbers<[1], [0], [0], [1], [0, 0, 1, 1], [], []>} : vector<4x32xf32>, vector<32x32xf32>, vector<4x32xf32> -> vector<4x32xf32>
    %149 = arith.divf %148, %146 : vector<4x32xf32>
    %cst_56 = arith.constant 0.000000e+00 : f32
    %150 = vector.broadcast %cst_56 : f32 to vector<32x4xf32>
    %151 = arith.cmpf oeq, %75, %150 : vector<32x4xf32>
    %cst_57 = arith.constant 0xFF800000 : f32
    %152 = vector.broadcast %cst_57 : f32 to vector<32x4xf32>
    %153 = arith.select %151, %152, %75 : vector<32x4xi1>, vector<32x4xf32>
    %154 = tpu.iota {dimensions = array<i32: 0>} : vector<32x4xi32>
    %cst_58 = arith.constant 0xFF800000 : f32
    %155 = vector.broadcast %cst_58 : f32 to vector<32x4xf32>
    %cst_59 = arith.constant 0xFF800000 : f32
    %c0_i32_60 = arith.constant 0 : i32
    %c8_i32_61 = arith.constant 8 : i32
    %156 = arith.muli %c0_i32_60, %c8_i32_61 : i32
    %157 = vector.broadcast %156 : i32 to vector<32x4xi32>
    %158 = arith.cmpi sge, %154, %157 : vector<32x4xi32>
    %c1_i32_62 = arith.constant 1 : i32
    %159 = arith.addi %c0_i32_60, %c1_i32_62 : i32
    %c8_i32_63 = arith.constant 8 : i32
    %160 = arith.muli %159, %c8_i32_63 : i32
    %161 = vector.broadcast %160 : i32 to vector<32x4xi32>
    %162 = arith.cmpi slt, %154, %161 : vector<32x4xi32>
    %163 = arith.andi %158, %162 : vector<32x4xi1>
    %164 = vector.broadcast %cst_59 : f32 to vector<32x4xf32>
    %165 = arith.select %163, %153, %164 : vector<32x4xi1>, vector<32x4xf32>
    %cst_64 = arith.constant dense<0xFF800000> : vector<4xf32>
    %166 = vector.multi_reduction <maximumf>, %165, %cst_64 [0] : vector<32x4xf32> to vector<4xf32>
    %167 = vector.shape_cast %166 : vector<4xf32> to vector<1x4xf32>
    %168 = vector.shape_cast %167 : vector<1x4xf32> to vector<1x4xf32>
    %169 = vector.broadcast %168 : vector<1x4xf32> to vector<32x4xf32>
    %170 = arith.select %163, %169, %155 : vector<32x4xi1>, vector<32x4xf32>
    %c1_i32_65 = arith.constant 1 : i32
    %c8_i32_66 = arith.constant 8 : i32
    %171 = arith.muli %c1_i32_65, %c8_i32_66 : i32
    %172 = vector.broadcast %171 : i32 to vector<32x4xi32>
    %173 = arith.cmpi sge, %154, %172 : vector<32x4xi32>
    %c1_i32_67 = arith.constant 1 : i32
    %174 = arith.addi %c1_i32_65, %c1_i32_67 : i32
    %c8_i32_68 = arith.constant 8 : i32
    %175 = arith.muli %174, %c8_i32_68 : i32
    %176 = vector.broadcast %175 : i32 to vector<32x4xi32>
    %177 = arith.cmpi slt, %154, %176 : vector<32x4xi32>
    %178 = arith.andi %173, %177 : vector<32x4xi1>
    %179 = vector.broadcast %cst_59 : f32 to vector<32x4xf32>
    %180 = arith.select %178, %153, %179 : vector<32x4xi1>, vector<32x4xf32>
    %cst_69 = arith.constant dense<0xFF800000> : vector<4xf32>
    %181 = vector.multi_reduction <maximumf>, %180, %cst_69 [0] : vector<32x4xf32> to vector<4xf32>
    %182 = vector.shape_cast %181 : vector<4xf32> to vector<1x4xf32>
    %183 = vector.shape_cast %182 : vector<1x4xf32> to vector<1x4xf32>
    %184 = vector.broadcast %183 : vector<1x4xf32> to vector<32x4xf32>
    %185 = arith.select %178, %184, %170 : vector<32x4xi1>, vector<32x4xf32>
    %c2_i32_70 = arith.constant 2 : i32
    %c8_i32_71 = arith.constant 8 : i32
    %186 = arith.muli %c2_i32_70, %c8_i32_71 : i32
    %187 = vector.broadcast %186 : i32 to vector<32x4xi32>
    %188 = arith.cmpi sge, %154, %187 : vector<32x4xi32>
    %c1_i32_72 = arith.constant 1 : i32
    %189 = arith.addi %c2_i32_70, %c1_i32_72 : i32
    %c8_i32_73 = arith.constant 8 : i32
    %190 = arith.muli %189, %c8_i32_73 : i32
    %191 = vector.broadcast %190 : i32 to vector<32x4xi32>
    %192 = arith.cmpi slt, %154, %191 : vector<32x4xi32>
    %193 = arith.andi %188, %192 : vector<32x4xi1>
    %194 = vector.broadcast %cst_59 : f32 to vector<32x4xf32>
    %195 = arith.select %193, %153, %194 : vector<32x4xi1>, vector<32x4xf32>
    %cst_74 = arith.constant dense<0xFF800000> : vector<4xf32>
    %196 = vector.multi_reduction <maximumf>, %195, %cst_74 [0] : vector<32x4xf32> to vector<4xf32>
    %197 = vector.shape_cast %196 : vector<4xf32> to vector<1x4xf32>
    %198 = vector.shape_cast %197 : vector<1x4xf32> to vector<1x4xf32>
    %199 = vector.broadcast %198 : vector<1x4xf32> to vector<32x4xf32>
    %200 = arith.select %193, %199, %185 : vector<32x4xi1>, vector<32x4xf32>
    %c3_i32_75 = arith.constant 3 : i32
    %c8_i32_76 = arith.constant 8 : i32
    %201 = arith.muli %c3_i32_75, %c8_i32_76 : i32
    %202 = vector.broadcast %201 : i32 to vector<32x4xi32>
    %203 = arith.cmpi sge, %154, %202 : vector<32x4xi32>
    %c1_i32_77 = arith.constant 1 : i32
    %204 = arith.addi %c3_i32_75, %c1_i32_77 : i32
    %c8_i32_78 = arith.constant 8 : i32
    %205 = arith.muli %204, %c8_i32_78 : i32
    %206 = vector.broadcast %205 : i32 to vector<32x4xi32>
    %207 = arith.cmpi slt, %154, %206 : vector<32x4xi32>
    %208 = arith.andi %203, %207 : vector<32x4xi1>
    %209 = vector.broadcast %cst_59 : f32 to vector<32x4xf32>
    %210 = arith.select %208, %153, %209 : vector<32x4xi1>, vector<32x4xf32>
    %cst_79 = arith.constant dense<0xFF800000> : vector<4xf32>
    %211 = vector.multi_reduction <maximumf>, %210, %cst_79 [0] : vector<32x4xf32> to vector<4xf32>
    %212 = vector.shape_cast %211 : vector<4xf32> to vector<1x4xf32>
    %213 = vector.shape_cast %212 : vector<1x4xf32> to vector<1x4xf32>
    %214 = vector.broadcast %213 : vector<1x4xf32> to vector<32x4xf32>
    %215 = arith.select %208, %214, %200 : vector<32x4xi1>, vector<32x4xf32>
    %c4_i32_80 = arith.constant 4 : i32
    %216 = arith.subf %153, %215 : vector<32x4xf32>
    %cst_81 = arith.constant 1.000000e+02 : f32
    %217 = vector.broadcast %cst_81 : f32 to vector<32x4xf32>
    %218 = arith.mulf %216, %217 : vector<32x4xf32>
    %219 = math.exp %218 : vector<32x4xf32>
    %cst_82 = arith.constant dense<0.000000e+00> : vector<4x4xf32>
    %220 = tpu.matmul %4, %219, %cst_82 {dimension_numbers = #tpu.dot_dimension_numbers<[1], [0], [0], [1], [0, 0, 1, 1], [], []>} : vector<4x32xf32>, vector<32x4xf32>, vector<4x4xf32> -> vector<4x4xf32>
    %221 = arith.mulf %75, %219 : vector<32x4xf32>
    %cst_83 = arith.constant dense<0.000000e+00> : vector<4x4xf32>
    %222 = tpu.matmul %4, %221, %cst_83 {dimension_numbers = #tpu.dot_dimension_numbers<[1], [0], [0], [1], [0, 0, 1, 1], [], []>} : vector<4x32xf32>, vector<32x4xf32>, vector<4x4xf32> -> vector<4x4xf32>
    %223 = tpu.reciprocal %220 {approx = true} : vector<4x4xf32> -> vector<4x4xf32>
    %224 = arith.mulf %222, %223 : vector<4x4xf32>
    %225 = tpu.iota {dimensions = array<i32: 1>} : vector<4x32xi32>
    %cst_84 = arith.constant 0xFF800000 : f32
    %226 = vector.broadcast %cst_84 : f32 to vector<4x32xf32>
    %cst_85 = arith.constant 0xFF800000 : f32
    %c0_i32_86 = arith.constant 0 : i32
    %c8_i32_87 = arith.constant 8 : i32
    %227 = arith.muli %c0_i32_86, %c8_i32_87 : i32
    %228 = vector.broadcast %227 : i32 to vector<4x32xi32>
    %229 = arith.cmpi sge, %225, %228 : vector<4x32xi32>
    %c1_i32_88 = arith.constant 1 : i32
    %230 = arith.addi %c0_i32_86, %c1_i32_88 : i32
    %c8_i32_89 = arith.constant 8 : i32
    %231 = arith.muli %230, %c8_i32_89 : i32
    %232 = vector.broadcast %231 : i32 to vector<4x32xi32>
    %233 = arith.cmpi slt, %225, %232 : vector<4x32xi32>
    %234 = arith.andi %229, %233 : vector<4x32xi1>
    %235 = vector.broadcast %cst_85 : f32 to vector<4x32xf32>
    %236 = arith.select %234, %149, %235 : vector<4x32xi1>, vector<4x32xf32>
    %cst_90 = arith.constant dense<0xFF800000> : vector<4xf32>
    %237 = vector.multi_reduction <maximumf>, %236, %cst_90 [1] : vector<4x32xf32> to vector<4xf32>
    %238 = vector.shape_cast %237 : vector<4xf32> to vector<4x1xf32>
    %239 = vector.shape_cast %238 : vector<4x1xf32> to vector<4x1xf32>
    %240 = vector.broadcast %239 : vector<4x1xf32> to vector<4x32xf32>
    %241 = arith.select %234, %240, %226 : vector<4x32xi1>, vector<4x32xf32>
    %c1_i32_91 = arith.constant 1 : i32
    %c8_i32_92 = arith.constant 8 : i32
    %242 = arith.muli %c1_i32_91, %c8_i32_92 : i32
    %243 = vector.broadcast %242 : i32 to vector<4x32xi32>
    %244 = arith.cmpi sge, %225, %243 : vector<4x32xi32>
    %c1_i32_93 = arith.constant 1 : i32
    %245 = arith.addi %c1_i32_91, %c1_i32_93 : i32
    %c8_i32_94 = arith.constant 8 : i32
    %246 = arith.muli %245, %c8_i32_94 : i32
    %247 = vector.broadcast %246 : i32 to vector<4x32xi32>
    %248 = arith.cmpi slt, %225, %247 : vector<4x32xi32>
    %249 = arith.andi %244, %248 : vector<4x32xi1>
    %250 = vector.broadcast %cst_85 : f32 to vector<4x32xf32>
    %251 = arith.select %249, %149, %250 : vector<4x32xi1>, vector<4x32xf32>
    %cst_95 = arith.constant dense<0xFF800000> : vector<4xf32>
    %252 = vector.multi_reduction <maximumf>, %251, %cst_95 [1] : vector<4x32xf32> to vector<4xf32>
    %253 = vector.shape_cast %252 : vector<4xf32> to vector<4x1xf32>
    %254 = vector.shape_cast %253 : vector<4x1xf32> to vector<4x1xf32>
    %255 = vector.broadcast %254 : vector<4x1xf32> to vector<4x32xf32>
    %256 = arith.select %249, %255, %241 : vector<4x32xi1>, vector<4x32xf32>
    %c2_i32_96 = arith.constant 2 : i32
    %c8_i32_97 = arith.constant 8 : i32
    %257 = arith.muli %c2_i32_96, %c8_i32_97 : i32
    %258 = vector.broadcast %257 : i32 to vector<4x32xi32>
    %259 = arith.cmpi sge, %225, %258 : vector<4x32xi32>
    %c1_i32_98 = arith.constant 1 : i32
    %260 = arith.addi %c2_i32_96, %c1_i32_98 : i32
    %c8_i32_99 = arith.constant 8 : i32
    %261 = arith.muli %260, %c8_i32_99 : i32
    %262 = vector.broadcast %261 : i32 to vector<4x32xi32>
    %263 = arith.cmpi slt, %225, %262 : vector<4x32xi32>
    %264 = arith.andi %259, %263 : vector<4x32xi1>
    %265 = vector.broadcast %cst_85 : f32 to vector<4x32xf32>
    %266 = arith.select %264, %149, %265 : vector<4x32xi1>, vector<4x32xf32>
    %cst_100 = arith.constant dense<0xFF800000> : vector<4xf32>
    %267 = vector.multi_reduction <maximumf>, %266, %cst_100 [1] : vector<4x32xf32> to vector<4xf32>
    %268 = vector.shape_cast %267 : vector<4xf32> to vector<4x1xf32>
    %269 = vector.shape_cast %268 : vector<4x1xf32> to vector<4x1xf32>
    %270 = vector.broadcast %269 : vector<4x1xf32> to vector<4x32xf32>
    %271 = arith.select %264, %270, %256 : vector<4x32xi1>, vector<4x32xf32>
    %c3_i32_101 = arith.constant 3 : i32
    %c8_i32_102 = arith.constant 8 : i32
    %272 = arith.muli %c3_i32_101, %c8_i32_102 : i32
    %273 = vector.broadcast %272 : i32 to vector<4x32xi32>
    %274 = arith.cmpi sge, %225, %273 : vector<4x32xi32>
    %c1_i32_103 = arith.constant 1 : i32
    %275 = arith.addi %c3_i32_101, %c1_i32_103 : i32
    %c8_i32_104 = arith.constant 8 : i32
    %276 = arith.muli %275, %c8_i32_104 : i32
    %277 = vector.broadcast %276 : i32 to vector<4x32xi32>
    %278 = arith.cmpi slt, %225, %277 : vector<4x32xi32>
    %279 = arith.andi %274, %278 : vector<4x32xi1>
    %280 = vector.broadcast %cst_85 : f32 to vector<4x32xf32>
    %281 = arith.select %279, %149, %280 : vector<4x32xi1>, vector<4x32xf32>
    %cst_105 = arith.constant dense<0xFF800000> : vector<4xf32>
    %282 = vector.multi_reduction <maximumf>, %281, %cst_105 [1] : vector<4x32xf32> to vector<4xf32>
    %283 = vector.shape_cast %282 : vector<4xf32> to vector<4x1xf32>
    %284 = vector.shape_cast %283 : vector<4x1xf32> to vector<4x1xf32>
    %285 = vector.broadcast %284 : vector<4x1xf32> to vector<4x32xf32>
    %286 = arith.select %279, %285, %271 : vector<4x32xi1>, vector<4x32xf32>
    %c4_i32_106 = arith.constant 4 : i32
    %287 = arith.subf %149, %286 : vector<4x32xf32>
    %cst_107 = arith.constant 1.000000e+02 : f32
    %288 = vector.broadcast %cst_107 : f32 to vector<4x32xf32>
    %289 = arith.mulf %287, %288 : vector<4x32xf32>
    %290 = math.exp %289 : vector<4x32xf32>
    %cst_108 = arith.constant dense<0.000000e+00> : vector<4x4xf32>
    %291 = tpu.matmul %290, %3, %cst_108 {dimension_numbers = #tpu.dot_dimension_numbers<[1], [0], [0], [1], [0, 0, 1, 1], [], []>} : vector<4x32xf32>, vector<32x4xf32>, vector<4x4xf32> -> vector<4x4xf32>
    %292 = arith.mulf %149, %290 : vector<4x32xf32>
    %cst_109 = arith.constant dense<0.000000e+00> : vector<4x4xf32>
    %293 = tpu.matmul %292, %3, %cst_109 {dimension_numbers = #tpu.dot_dimension_numbers<[1], [0], [0], [1], [0, 0, 1, 1], [], []>} : vector<4x32xf32>, vector<32x4xf32>, vector<4x4xf32> -> vector<4x4xf32>
    %294 = tpu.reciprocal %291 {approx = true} : vector<4x4xf32> -> vector<4x4xf32>
    %295 = arith.mulf %293, %294 : vector<4x4xf32>
    %296 = arith.addf %224, %295 : vector<4x4xf32>
    %cst_110 = arith.constant 5.000000e-01 : f32
    %297 = vector.broadcast %cst_110 : f32 to vector<4x4xf32>
    %298 = arith.mulf %297, %296 : vector<4x4xf32>
    %c0_111 = arith.constant 0 : index
    %c0_112 = arith.constant 0 : index
    %c0_113 = arith.constant 0 : index
    %c0_114 = arith.constant 0 : index
    %299 = vector.load %arg6[%c0_111, %c0_112, %c0_113, %c0_114] : memref<1x1x4x4xf32, #tpu.memory_space<vmem>>, vector<1x1x4x4xf32>
    %300 = vector.shape_cast %299 : vector<1x1x4x4xf32> to vector<4x4xf32>
    %301 = vector.shape_cast %298 : vector<4x4xf32> to vector<1x1x4x4xf32>
    tpu.vector_store %arg6[%c0_111, %c0_112, %c0_113, %c0_114], %301 {strides = array<i32>} : memref<1x1x4x4xf32, #tpu.memory_space<vmem>>, vector<1x1x4x4xf32>,
    return
  }
  func.func @transform_0(%arg0: i32, %arg1: i32) -> (i32, i32) {
    %c0_i32 = arith.constant 0 : i32
    %c0_i32_0 = arith.constant 0 : i32
    return %arg0, %c0_i32 : i32, i32
  }
  func.func @transform_1(%arg0: i32, %arg1: i32) -> (i32, i32, i32) {
    %c0_i32 = arith.constant 0 : i32
    %c0_i32_0 = arith.constant 0 : i32
    %c0_i32_1 = arith.constant 0 : i32
    return %arg1, %c0_i32, %c0_i32_0 : i32, i32, i32
  }
  func.func @transform_2(%arg0: i32, %arg1: i32) -> (i32, i32) {
    %c0_i32 = arith.constant 0 : i32
    %c0_i32_0 = arith.constant 0 : i32
    %c0_i32_1 = arith.constant 0 : i32
    return %c0_i32, %c0_i32_0 : i32, i32
  }
  func.func @transform_3(%arg0: i32, %arg1: i32) -> (i32, i32) {
    %c0_i32 = arith.constant 0 : i32
    %c0_i32_0 = arith.constant 0 : i32
    %c0_i32_1 = arith.constant 0 : i32
    return %c0_i32, %c0_i32_0 : i32, i32
  }
  func.func @transform_4(%arg0: i32, %arg1: i32) -> (i32, i32, i32, i32) {
    %c0_i32 = arith.constant 0 : i32
    %c0_i32_0 = arith.constant 0 : i32
    %c0_i32_1 = arith.constant 0 : i32
    return %arg0, %arg1, %c0_i32, %c0_i32_0 : i32, i32, i32, i32
  }
}

</mosaic_0001>

<llo_original>
// kernel: tpu_custom_call.1
$region0: #{tpu_custom_call.1}
  #allocation0 [shape = 'u32[]', space=smem, size = 0x4, offset = 0x4, fixed_abs, tag = 'smem constant byte address 0x4 - core index']
  #allocation1 [shape = 'u32[144,128]{1,0:T(1,128)}', space=vmem, size = 0x12000, scoped, tag = 'internal scratch']
  %s0 = inlined_call_operand.vmem [shape: f32[64,64], index: 0, kind: input, shape index: {}]
  %s1 = inlined_call_operand.vmem [shape: f32[2,64,32], index: 1, kind: input, shape index: {}]
  %s2 = inlined_call_operand.vmem [shape: f32[32,4], index: 2, kind: input, shape index: {}]
  %s3 = inlined_call_operand.vmem [shape: f32[4,32], index: 3, kind: input, shape index: {}]
  %s4 = inlined_call_operand.hbm [shape: f32[2,2,4,4], index: 4, kind: output, shape index: {}]
  %s5 = sld [smem:[#allocation0]]
  $region49: #{tpu_custom_call.1} parent=0
    _
  %s7 = ssub.s32 1, %s5
  %s8 = scalar_select 0, %s7, %s5
  $region1: #{tpu_custom_call.1} parent=0
    #allocation2 [shape = 'u8[4096]{0}', space=vmem, size = 0x1000, scoped, tag = 'output window, operand 0']
    #allocation3 [shape = 's32[2]{0}', space=sflag, size = 0x8, scoped, tag = 'scoped memory for tpu_custom_call.1']
    %9 = vsyncpa [#allocation3], 0
    %s10 = scalar_lea.sflag [#allocation3], 1
    %11 = vsyncpa %s10, 0
    loop: start=0, step=1, limit=6
    $region2: #{tpu_custom_call.1} parent=1 // loop_pre_header
      _
    $region3: #{tpu_custom_call.1} parent=1 // loop_header
      %s13 = sphi 0, %s17
      %p14 = scmp.ge.s32.totalorder %s13, 6
      %s20 = sphi 0, %s32
      %s21 = sphi 0, %s28
      %s22 = sphi 0, %s20
      %s23 = sphi 0, %s21
      %s24 = sphi 0, %s22
      %s25 = sphi 0, %s23
      %s35 = sphi 0, %s37
      %s38 = sphi 0, %s35
      %s39 = sphi 0, %s38
      %s55 = sphi 0, %s39
      %s61 = sphi 0, %s63
      %s64 = sphi 0, %s61
      %s65 = sphi 0, %s64
      %s81 = sphi 0, %s65
      %s85 = sphi 0, %s85
      %s87 = sphi 0, %s85
      %s88 = sphi 0, %s87
      %s102 = sphi 0, %s88
      %s106 = sphi 0, %s106
      %s108 = sphi 0, %s106
      %s109 = sphi 0, %s108
      %s123 = sphi 0, %s109
      %s131 = sphi 0, %s133
      %s134 = sphi 0, %s131
      %s135 = sphi 0, %s134
      %s151 = sphi 0, %s135
    $region4: #{tpu_custom_call.1} parent=1 // loop_header_branch
      %16 = sbr.rel (%p14) target = $region8
    $region5: #{tpu_custom_call.1} parent=1 // loop_body
      %s18 = ssub.s32 %s13, 1
      %s19 = ssub.s32 %s13, 2
      %s26 = sadd.s32 1, %s21
      %p27 = scmp.ge.s32.totalorder %s26, 2
      %s28 = scalar_select %p27, 0, %s26
      %s29 = sadd.s32 1, %s20
      %s30 = scalar_select %p27, %s29, %s20
      %p31 = scmp.ge.s32.totalorder %s30, 2
      %s32 = scalar_select %p31, 0, %s30
      %s33 = ssub.s32 %s20, %s32
      %p34 = scmp.eq.s32.totalorder %s33, 0
      %s36 = sadd.s32 %s35, 1
      %s37 = scalar_select %p34, %s35, %s36
      %p40 = pneg %p34
      %p41 = scmp.eq.s32.totalorder %s13, 3
      %p42 = por %p40, %p41
      %p43 = scmp.ne.s32.totalorder %s35, %s38
      %p44 = scmp.eq.s32.totalorder %s13, 0
      %p45 = por %p43, %p44
      %p46 = scmp.ne.s32.totalorder %s35, %s38
      %p47 = scmp.eq.s32.totalorder %s18, 3
      %p48 = por %p46, %p47
      %p49 = scmp.ne.s32.totalorder %s38, %s39
      %p50 = scmp.eq.s32.totalorder %s18, 0
      %p51 = por %p49, %p50
      %p52 = scmp.ne.s32.totalorder %s38, %s39
      %p53 = scmp.eq.s32.totalorder %s19, 3
      %p54 = por %p52, %p53
      %p56 = scmp.ne.s32.totalorder %s39, %s55
      %p57 = scmp.eq.s32.totalorder %s19, 0
      %p58 = por %p56, %p57
      %s59 = ssub.s32 %s21, %s28
      %p60 = scmp.eq.s32.totalorder %s59, 0
      %s62 = sadd.s32 %s61, 1
      %s63 = scalar_select %p60, %s61, %s62
      %p66 = pneg %p60
      %p67 = scmp.eq.s32.totalorder %s13, 3
      %p68 = por %p66, %p67
      %p69 = scmp.ne.s32.totalorder %s61, %s64
      %p70 = scmp.eq.s32.totalorder %s13, 0
      %p71 = por %p69, %p70
      %p72 = scmp.ne.s32.totalorder %s61, %s64
      %p73 = scmp.eq.s32.totalorder %s18, 3
      %p74 = por %p72, %p73
      %p75 = scmp.ne.s32.totalorder %s64, %s65
      %p76 = scmp.eq.s32.totalorder %s18, 0
      %p77 = por %p75, %p76
      %p78 = scmp.ne.s32.totalorder %s64, %s65
      %p79 = scmp.eq.s32.totalorder %s19, 3
      %p80 = por %p78, %p79
      %p82 = scmp.ne.s32.totalorder %s65, %s81
      %p83 = scmp.eq.s32.totalorder %s19, 0
      %p84 = por %p82, %p83
      %s86 = sadd.s32 %s85, 1
      %p89 = scmp.eq.s32.totalorder %s13, 3
      %p90 = scmp.ne.s32.totalorder %s85, %s87
      %p91 = scmp.eq.s32.totalorder %s13, 0
      %p92 = por %p90, %p91
      %p93 = scmp.ne.s32.totalorder %s85, %s87
      %p94 = scmp.eq.s32.totalorder %s18, 3
      %p95 = por %p93, %p94
      %p96 = scmp.ne.s32.totalorder %s87, %s88
      %p97 = scmp.eq.s32.totalorder %s18, 0
      %p98 = por %p96, %p97
      %p99 = scmp.ne.s32.totalorder %s87, %s88
      %p100 = scmp.eq.s32.totalorder %s19, 3
      %p101 = por %p99, %p100
      %p103 = scmp.ne.s32.totalorder %s88, %s102
      %p104 = scmp.eq.s32.totalorder %s19, 0
      %p105 = por %p103, %p104
      %s107 = sadd.s32 %s106, 1
      %p110 = scmp.eq.s32.totalorder %s13, 3
      %p111 = scmp.ne.s32.totalorder %s106, %s108
      %p112 = scmp.eq.s32.totalorder %s13, 0
      %p113 = por %p111, %p112
      %p114 = scmp.ne.s32.totalorder %s106, %s108
      %p115 = scmp.eq.s32.totalorder %s18, 3
      %p116 = por %p114, %p115
      %p117 = scmp.ne.s32.totalorder %s108, %s109
      %p118 = scmp.eq.s32.totalorder %s18, 0
      %p119 = por %p117, %p118
      %p120 = scmp.ne.s32.totalorder %s108, %s109
      %p121 = scmp.eq.s32.totalorder %s19, 3
      %p122 = por %p120, %p121
      %p124 = scmp.ne.s32.totalorder %s109, %s123
      %p125 = scmp.eq.s32.totalorder %s19, 0
      %p126 = por %p124, %p125
      %s127 = ssub.s32 %s20, %s32
      %s128 = ssub.s32 %s21, %s28
      %s129 = sor.u32 %s127, %s128
      %p130 = scmp.eq.s32.totalorder %s129, 0
      %s132 = sadd.s32 %s131, 1
      %s133 = scalar_select %p130, %s131, %s132
      %p136 = pneg %p130
      %p137 = scmp.eq.s32.totalorder %s13, 3
      %p138 = por %p136, %p137
      %p139 = scmp.ne.s32.totalorder %s131, %s134
      %p140 = scmp.eq.s32.totalorder %s13, 0
      %p141 = por %p139, %p140
      %p142 = scmp.ne.s32.totalorder %s131, %s134
      %p143 = scmp.eq.s32.totalorder %s18, 3
      %p144 = por %p142, %p143
      %p145 = scmp.ne.s32.totalorder %s134, %s135
      %p146 = scmp.eq.s32.totalorder %s18, 0
      %p147 = por %p145, %p146
      %p148 = scmp.ne.s32.totalorder %s134, %s135
      %p149 = scmp.eq.s32.totalorder %s19, 3
      %p150 = por %p148, %p149
      %p152 = scmp.ne.s32.totalorder %s135, %s151
      %p153 = scmp.eq.s32.totalorder %s19, 0
      %p154 = por %p152, %p153
      %p155 = scmp.le.s32.totalorder 1, %s13
      %p156 = scmp.lt.s32.totalorder %s13, 5
      %p157 = pnand %p155, %p156
      %p158 = pneg %p157
      // Predicated region
      $region9: #{tpu_custom_call.1} parent=5 // pred_check
        _
      $region10: #{tpu_custom_call.1} parent=5 // pred_check_branch
        %160 = sbr.rel (%p157) target = $region12
      $region11: #{tpu_custom_call.1} parent=5 // pred_region
        %s161 = ssub.s32 %s13, 1
        // Predicated region
        $region13: #{tpu_custom_call.1} parent=11 // pred_check
          %p162 = pneg %p98
        $region14: #{tpu_custom_call.1} parent=11 // pred_check_branch
          %164 = sbr.rel (%p162) target = $region16
        $region15: #{tpu_custom_call.1} parent=11 // pred_region
          _
        $region16: #{tpu_custom_call.1} parent=11 // pred_fallthru
          _
        // Predicated region
        $region17: #{tpu_custom_call.1} parent=11 // pred_check
          %p165 = pneg %p119
        $region18: #{tpu_custom_call.1} parent=11 // pred_check_branch
          %167 = sbr.rel (%p165) target = $region20
        $region19: #{tpu_custom_call.1} parent=11 // pred_region
          _
        $region20: #{tpu_custom_call.1} parent=11 // pred_fallthru
          _
      $region12: #{tpu_custom_call.1} parent=5 // pred_fallthru
        _
      %p168 = scmp.lt.s32.totalorder %s13, 4
      // Predicated region
      $region21: #{tpu_custom_call.1} parent=5 // pred_check
        %p169 = pneg %p168
      $region22: #{tpu_custom_call.1} parent=5 // pred_check_branch
        %171 = sbr.rel (%p169) target = $region24
      $region23: #{tpu_custom_call.1} parent=5 // pred_region
        // Predicated region
        $region25: #{tpu_custom_call.1} parent=23 // pred_check
          %p172 = pneg %p45
        $region26: #{tpu_custom_call.1} parent=23 // pred_check_branch
          %174 = sbr.rel (%p172) target = $region28
        $region27: #{tpu_custom_call.1} parent=23 // pred_region
          %s175 = smul.u32 4, %s20
          %p176 = scmp.lt.s32.totalorder %s175, 7
          %s177 = scalar_select %p176, %s175, 7
          %s178 = smul.addr %s177, 8
          %s179 = scalar_lea.vmem %s0, %s178
          %s180 = smul.u32 4, %s20
        $region28: #{tpu_custom_call.1} parent=23 // pred_fallthru
          _
        // Predicated region
        $region29: #{tpu_custom_call.1} parent=23 // pred_check
          %p181 = pneg %p71
        $region30: #{tpu_custom_call.1} parent=23 // pred_check_branch
          %183 = sbr.rel (%p181) target = $region32
        $region31: #{tpu_custom_call.1} parent=23 // pred_region
          %p184 = scmp.lt.s32.totalorder %s21, 1
          %s185 = scalar_select %p184, %s21, 1
          %s186 = smul.addr %s185, 8
          %s187 = smul.addr %s186, 8
          %s188 = scalar_lea.vmem %s1, %s187
        $region32: #{tpu_custom_call.1} parent=23 // pred_fallthru
          _
      $region24: #{tpu_custom_call.1} parent=5 // pred_fallthru
        _
      %p189 = scmp.le.s32.totalorder 1, %s13
      %p190 = scmp.lt.s32.totalorder %s13, 5
      %p191 = pnand %p189, %p190
      %p192 = pneg %p191
      // Predicated region
      $region33: #{tpu_custom_call.1} parent=5 // pred_check
        _
      $region34: #{tpu_custom_call.1} parent=5 // pred_check_branch
        %194 = sbr.rel (%p191) target = $region36
      $region35: #{tpu_custom_call.1} parent=5 // pred_region
        %s195 = ssub.s32 %s13, 1
        %s196 = smul.u32 4, %s22
        %p197 = scmp.lt.s32.totalorder %s196, 7
        %s198 = scalar_select %p197, %s196, 7
        %s199 = smul.addr %s198, 8
        %s200 = scalar_lea.vmem %s0, %s199
        %p201 = pneg %p51
        %p202 = pneg %p48
        %p203 = scmp.lt.s32.totalorder %s23, 1
        %s204 = scalar_select %p203, %s23, 1
        %s205 = smul.addr %s204, 8
        %s206 = smul.addr %s205, 8
        %s207 = scalar_lea.vmem %s1, %s206
        %p208 = pneg %p77
        %p209 = pneg %p74
        %p210 = pneg %p98
        %p211 = pneg %p95
        %p212 = pneg %p119
        %p213 = pneg %p116
        %p214 = pneg %p147
        %p215 = pneg %p144
        %s216 = sand.u32 %s134, 1
        %s217 = scalar_lea.sflag [#allocation3], %s216
        %s218 = sand.u32 %s134, 1
        %s219 = smul.addr %s218, 4
        %s220 = scalar_lea.vmem [#allocation2], %s219
        %s221 = smul.u32 4, %s22
        %p222 = scmp.lt.s32.totalorder %s221, 7
        %s223 = scalar_select %p222, %s221, 7
        %s224 = smul.addr %s223, 8
        %s225 = scalar_lea.vmem %s0, %s224
        %s226 = smul.u32 4, %s22
        %p227 = scmp.lt.s32.totalorder %s23, 1
        %s228 = scalar_select %p227, %s23, 1
        %s229 = smul.addr %s228, 8
        %s230 = smul.addr %s229, 8
        %s231 = scalar_lea.vmem %s1, %s230
        %v232 = vld [vmem:[%s225] sm:$0xff]
        %v233 = vld [vmem:[%s225 + $0x8] sm:$0xff]
        %v234 = vld [vmem:[%s225 + $0x10] sm:$0xff]
        %v235 = vld [vmem:[%s225 + $0x18] sm:$0xff]
        %v236 = vld [vmem:[%s231] sm:$0xff]
        %v237 = vld [vmem:[%s231 + $0x8] sm:$0xff]
        %v238 = vld [vmem:[%s231 + $0x10] sm:$0xff]
        %v239 = vld [vmem:[%s231 + $0x18] sm:$0xff]
        %v240 = vld [vmem:[%s231 + $0x20] sm:$0xff]
        %v241 = vld [vmem:[%s231 + $0x28] sm:$0xff]
        %v242 = vld [vmem:[%s231 + $0x30] sm:$0xff]
        %v243 = vld [vmem:[%s231 + $0x38] sm:$0xff]
        %v244 = vld [vmem:[%s2] sm:$0xff]
        %v245 = vld [vmem:[%s2 + $0x8] sm:$0xff]
        %v246 = vld [vmem:[%s2 + $0x10] sm:$0xff]
        %v247 = vld [vmem:[%s2 + $0x18] sm:$0xff]
        %v248 = vld [vmem:[%s3] sm:$0xf]
        %vm249 = vcmask 523264
        %v251 = vsel %vm249, %v232, 0
        %v254 = vsel %vm249, %v233, 0
        %v257 = vsel %vm249, %v234, 0
        %v260 = vsel %vm249, %v235, 0
        %262 = vmatprep.subr.mxu0 0.0
        %263 = vmatpush1.msra.mxu0 %v236
        %264 = vmatprep.subr.mxu0 0.0
        %265 = vmatpush1.msra.mxu0 %v237
        %266 = vmatprep.subr.mxu0 0.0
        %267 = vmatpush1.msra.mxu0 %v238
        %268 = vmatprep.subr.mxu0 0.0
        %269 = vmatpush1.msra.mxu0 %v239
        %270 = vmatprep.subr.mxu0 0.0
        %271 = vmatpush1.msra.mxu0 %v240
        %272 = vmatprep.subr.mxu0 0.0
        %273 = vmatpush1.msra.mxu0 %v241
        %274 = vmatprep.subr.mxu0 0.0
        %275 = vmatpush1.msra.mxu0 %v242
        %276 = vmatprep.subr.mxu0 0.0
        %277 = vmatpush1.msra.mxu0 %v243
        %278 = vmatprep.subr.mxu0 0.0
        %279 = vmatpush1.msra.mxu0 0.0
        %280 = vmatprep.subr.mxu0 0.0
        %281 = vmatpush1.msra.mxu0 0.0
        %282 = vmatprep.subr.mxu0 0.0
        %283 = vmatpush1.msra.mxu0 0.0
        %284 = vmatprep.subr.mxu0 0.0
        %285 = vmatpush1.msra.mxu0 0.0
        %286 = vmatprep.subr.mxu0 0.0
        %287 = vmatpush1.msra.mxu0 0.0
        %288 = vmatprep.subr.mxu0 0.0
        %289 = vmatpush1.msra.mxu0 0.0
        %290 = vmatprep.subr.mxu0 0.0
        %291 = vmatpush1.msra.mxu0 0.0
        %292 = vmatprep.subr.mxu0 0.0
        %293 = vmatpush1.msra.mxu0 0.0
        %294 = vmatprep.subr.mxu0 0.0
        %295 = vmatpush1.msra.mxu0 0.0
        %296 = vmatprep.subr.mxu0 0.0
        %297 = vmatpush1.msra.mxu0 0.0
        %298 = vmatprep.subr.mxu0 0.0
        %299 = vmatpush1.msra.mxu0 0.0
        %300 = vmatprep.subr.mxu0 0.0
        %301 = vmatpush1.msra.mxu0 0.0
        %302 = vmatprep.subr.mxu0 0.0
        %303 = vmatpush1.msra.mxu0 0.0
        %304 = vmatprep.subr.mxu0 0.0
        %305 = vmatpush1.msra.mxu0 0.0
        %306 = vmatprep.subr.mxu0 0.0
        %307 = vmatpush1.msra.mxu0 0.0
        %308 = vmatprep.subr.mxu0 0.0
        %309 = vmatpush1.msra.mxu0 0.0
        %310 = vmatprep.subr.mxu0 0.0
        %311 = vmatpush1.msra.mxu0 0.0
        %312 = vmatprep.subr.mxu0 0.0
        %313 = vmatpush1.msra.mxu0 0.0
        %314 = vmatprep.subr.mxu0 0.0
        %315 = vmatpush1.msra.mxu0 0.0
        %316 = vmatprep.subr.mxu0 0.0
        %317 = vmatpush1.msra.mxu0 0.0
        %318 = vmatprep.subr.mxu0 0.0
        %319 = vmatpush1.msra.mxu0 0.0
        %320 = vmatprep.subr.mxu0 0.0
        %321 = vmatpush1.msra.mxu0 0.0
        %322 = vmatprep.subr.mxu0 0.0
        %323 = vmatpush1.msra.mxu0 0.0
        %324 = vmatprep.subr.mxu0 0.0
        %325 = vmatpush1.msra.mxu0 0.0
        %326 = vmatprep.mubr.f32.mxu0 0.0
        %327 = vmatmul.mubr.f32.gmra.mrb[0].mxu0 %v251
        %v328 = vpop.f32.mrb[0].mxu0
        %v329 = vadd.f32 0.0, %v328
        %v330 = vpop.f32.mrb[0].mxu0
        %331 = vmatprep.mubr.f32.mxu0 0.0
        %332 = vmatmul.mubr.f32.gmra.mrb[0].mxu0 %v254
        %v333 = vpop.f32.mrb[0].mxu0
        %v334 = vadd.f32 0.0, %v333
        %v335 = vpop.f32.mrb[0].mxu0
        %336 = vmatprep.mubr.f32.mxu0 0.0
        %337 = vmatmul.mubr.f32.gmra.mrb[0].mxu0 %v257
        %v338 = vpop.f32.mrb[0].mxu0
        %v339 = vadd.f32 0.0, %v338
        %v340 = vpop.f32.mrb[0].mxu0
        %341 = vmatprep.mubr.f32.mxu0 0.0
        %342 = vmatmul.mubr.f32.gmra.mrb[0].mxu0 %v260
        %v343 = vpop.f32.mrb[0].mxu0
        %v344 = vadd.f32 0.0, %v343
        %v345 = vpop.f32.mrb[0].mxu0
        %346 = vdwg.mxu0
        %v347 = vlaneseq
        %v348 = vand.u32 %v347, 127
        %vm349 = vcmp.ge.s32.totalorder %v348, 0
        %vm350 = vcmp.lt.s32.totalorder %v348, 8
        %vm351 = vmand %vm349, %vm350
        %v352 = vsel %vm351, %v329, -inf
        %v353 = vsel %vm351, %v334, -inf
        %v354 = vsel %vm351, %v339, -inf
        %v355 = vsel %vm351, %v344, -inf
        %vm356 = vcmask 261120
        %v357 = vsel %vm356, %v352, -inf
        %358 = vmax.xlane.f32.xlu0 %v357
        %v359 = vpop.xlane.xlu0 %358
        %v360 = vsel %vm356, %v353, -inf
        %361 = vmax.xlane.f32.xlu0 %v360
        %v362 = vpop.xlane.xlu0 %361
        %v363 = vsel %vm356, %v354, -inf
        %364 = vmax.xlane.f32.xlu0 %v363
        %v365 = vpop.xlane.xlu0 %364
        %v366 = vsel %vm356, %v355, -inf
        %367 = vmax.xlane.f32.xlu0 %v366
        %v368 = vpop.xlane.xlu0 %367
        %v369 = vsel %vm351, %v359, -inf
        %v370 = vsel %vm351, %v362, -inf
        %v371 = vsel %vm351, %v365, -inf
        %v372 = vsel %vm351, %v368, -inf
        %vm373 = vcmp.ge.s32.totalorder %v348, 8
        %vm374 = vcmp.lt.s32.totalorder %v348, 16
        %vm375 = vmand %vm373, %vm374
        %v376 = vsel %vm375, %v329, -inf
        %v377 = vsel %vm375, %v334, -inf
        %v378 = vsel %vm375, %v339, -inf
        %v379 = vsel %vm375, %v344, -inf
        %v380 = vsel %vm356, %v376, -inf
        %381 = vmax.xlane.f32.xlu0 %v380
        %v382 = vpop.xlane.xlu0 %381
        %v383 = vsel %vm356, %v377, -inf
        %384 = vmax.xlane.f32.xlu0 %v383
        %v385 = vpop.xlane.xlu0 %384
        %v386 = vsel %vm356, %v378, -inf
        %387 = vmax.xlane.f32.xlu0 %v386
        %v388 = vpop.xlane.xlu0 %387
        %v389 = vsel %vm356, %v379, -inf
        %390 = vmax.xlane.f32.xlu0 %v389
        %v391 = vpop.xlane.xlu0 %390
        %v392 = vsel %vm375, %v382, %v369
        %v393 = vsel %vm375, %v385, %v370
        %v394 = vsel %vm375, %v388, %v371
        %v395 = vsel %vm375, %v391, %v372
        %vm396 = vcmp.ge.s32.totalorder %v348, 16
        %vm397 = vcmp.lt.s32.totalorder %v348, 24
        %vm398 = vmand %vm396, %vm397
        %v399 = vsel %vm398, %v329, -inf
        %v400 = vsel %vm398, %v334, -inf
        %v401 = vsel %vm398, %v339, -inf
        %v402 = vsel %vm398, %v344, -inf
        %v403 = vsel %vm356, %v399, -inf
        %404 = vmax.xlane.f32.xlu0 %v403
        %v405 = vpop.xlane.xlu0 %404
        %v406 = vsel %vm356, %v400, -inf
        %407 = vmax.xlane.f32.xlu0 %v406
        %v408 = vpop.xlane.xlu0 %407
        %v409 = vsel %vm356, %v401, -inf
        %410 = vmax.xlane.f32.xlu0 %v409
        %v411 = vpop.xlane.xlu0 %410
        %v412 = vsel %vm356, %v402, -inf
        %413 = vmax.xlane.f32.xlu0 %v412
        %v414 = vpop.xlane.xlu0 %413
        %v415 = vsel %vm398, %v405, %v392
        %v416 = vsel %vm398, %v408, %v393
        %v417 = vsel %vm398, %v411, %v394
        %v418 = vsel %vm398, %v414, %v395
        %vm419 = vcmp.ge.s32.totalorder %v348, 24
        %vm420 = vcmp.lt.s32.totalorder %v348, 32
        %vm421 = vmand %vm419, %vm420
        %v422 = vsel %vm421, %v329, -inf
        %v423 = vsel %vm421, %v334, -inf
        %v424 = vsel %vm421, %v339, -inf
        %v425 = vsel %vm421, %v344, -inf
        %v426 = vsel %vm356, %v422, -inf
        %427 = vmax.xlane.f32.xlu0 %v426
        %v428 = vpop.xlane.xlu0 %427
        %v429 = vsel %vm356, %v423, -inf
        %430 = vmax.xlane.f32.xlu0 %v429
        %v431 = vpop.xlane.xlu0 %430
        %v432 = vsel %vm356, %v424, -inf
        %433 = vmax.xlane.f32.xlu0 %v432
        %v434 = vpop.xlane.xlu0 %433
        %v435 = vsel %vm356, %v425, -inf
        %436 = vmax.xlane.f32.xlu0 %v435
        %v437 = vpop.xlane.xlu0 %436
        %v438 = vsel %vm421, %v428, %v415
        %v439 = vsel %vm421, %v431, %v416
        %v440 = vsel %vm421, %v434, %v417
        %v441 = vsel %vm421, %v437, %v418
        %v442 = vsub.f32 %v329, %v438
        %v443 = vsub.f32 %v334, %v439
        %v444 = vsub.f32 %v339, %v440
        %v445 = vsub.f32 %v344, %v441
        %v446 = vmul.f32 %v442, 100.0
        %v447 = vmul.f32 %v443, 100.0
        %v448 = vmul.f32 %v444, 100.0
        %v449 = vmul.f32 %v445, 100.0
        %v450 = vmul.f32 %v446, 1.442695
        %v451 = vpow.pop %v450
        %v452 = vmul.f32 %v447, 1.442695
        %v453 = vpow.pop %v452
        %v454 = vmul.f32 %v448, 1.442695
        %v455 = vpow.pop %v454
        %v456 = vmul.f32 %v449, 1.442695
        %v457 = vpow.pop %v456
        %v459 = vsel %vm356, %v451, 0
        %v462 = vsel %vm356, %v453, 0
        %v465 = vsel %vm356, %v455, 0
        %v468 = vsel %vm356, %v457, 0
        %470 = vmatprep.subr.mxu0 0.0
        %471 = vmatpush1.msra.mxu0 %v244
        %472 = vmatprep.subr.mxu0 0.0
        %473 = vmatpush1.msra.mxu0 %v245
        %474 = vmatprep.subr.mxu0 0.0
        %475 = vmatpush1.msra.mxu0 %v246
        %476 = vmatprep.subr.mxu0 0.0
        %477 = vmatpush1.msra.mxu0 %v247
        %478 = vmatprep.subr.mxu0 0.0
        %479 = vmatpush1.msra.mxu0 0.0
        %480 = vmatprep.subr.mxu0 0.0
        %481 = vmatpush1.msra.mxu0 0.0
        %482 = vmatprep.subr.mxu0 0.0
        %483 = vmatpush1.msra.mxu0 0.0
        %484 = vmatprep.subr.mxu0 0.0
        %485 = vmatpush1.msra.mxu0 0.0
        %486 = vmatprep.subr.mxu0 0.0
        %487 = vmatpush1.msra.mxu0 0.0
        %488 = vmatprep.subr.mxu0 0.0
        %489 = vmatpush1.msra.mxu0 0.0
        %490 = vmatprep.subr.mxu0 0.0
        %491 = vmatpush1.msra.mxu0 0.0
        %492 = vmatprep.subr.mxu0 0.0
        %493 = vmatpush1.msra.mxu0 0.0
        %494 = vmatprep.subr.mxu0 0.0
        %495 = vmatpush1.msra.mxu0 0.0
        %496 = vmatprep.subr.mxu0 0.0
        %497 = vmatpush1.msra.mxu0 0.0
        %498 = vmatprep.subr.mxu0 0.0
        %499 = vmatpush1.msra.mxu0 0.0
        %500 = vmatprep.subr.mxu0 0.0
        %501 = vmatpush1.msra.mxu0 0.0
        %502 = vmatprep.subr.mxu0 0.0
        %503 = vmatpush1.msra.mxu0 0.0
        %504 = vmatprep.subr.mxu0 0.0
        %505 = vmatpush1.msra.mxu0 0.0
        %506 = vmatprep.subr.mxu0 0.0
        %507 = vmatpush1.msra.mxu0 0.0
        %508 = vmatprep.subr.mxu0 0.0
        %509 = vmatpush1.msra.mxu0 0.0
        %510 = vmatprep.subr.mxu0 0.0
        %511 = vmatpush1.msra.mxu0 0.0
        %512 = vmatprep.subr.mxu0 0.0
        %513 = vmatpush1.msra.mxu0 0.0
        %514 = vmatprep.subr.mxu0 0.0
        %515 = vmatpush1.msra.mxu0 0.0
        %516 = vmatprep.subr.mxu0 0.0
        %517 = vmatpush1.msra.mxu0 0.0
        %518 = vmatprep.subr.mxu0 0.0
        %519 = vmatpush1.msra.mxu0 0.0
        %520 = vmatprep.subr.mxu0 0.0
        %521 = vmatpush1.msra.mxu0 0.0
        %522 = vmatprep.subr.mxu0 0.0
        %523 = vmatpush1.msra.mxu0 0.0
        %524 = vmatprep.subr.mxu0 0.0
        %525 = vmatpush1.msra.mxu0 0.0
        %526 = vmatprep.subr.mxu0 0.0
        %527 = vmatpush1.msra.mxu0 0.0
        %528 = vmatprep.subr.mxu0 0.0
        %529 = vmatpush1.msra.mxu0 0.0
        %530 = vmatprep.subr.mxu0 0.0
        %531 = vmatpush1.msra.mxu0 0.0
        %532 = vmatprep.subr.mxu0 0.0
        %533 = vmatpush1.msra.mxu0 0.0
        %534 = vmatprep.mubr.f32.mxu0 0.0
        %535 = vmatmul.mubr.f32.gmra.mrb[0].mxu0 %v459
        %v536 = vpop.f32.mrb[0].mxu0
        %v537 = vadd.f32 0.0, %v536
        %v538 = vpop.f32.mrb[0].mxu0
        %539 = vmatprep.mubr.f32.mxu0 0.0
        %540 = vmatmul.mubr.f32.gmra.mrb[0].mxu0 %v462
        %v541 = vpop.f32.mrb[0].mxu0
        %v542 = vadd.f32 0.0, %v541
        %v543 = vpop.f32.mrb[0].mxu0
        %544 = vmatprep.mubr.f32.mxu0 0.0
        %545 = vmatmul.mubr.f32.gmra.mrb[0].mxu0 %v465
        %v546 = vpop.f32.mrb[0].mxu0
        %v547 = vadd.f32 0.0, %v546
        %v548 = vpop.f32.mrb[0].mxu0
        %549 = vmatprep.mubr.f32.mxu0 0.0
        %550 = vmatmul.mubr.f32.gmra.mrb[0].mxu0 %v468
        %v551 = vpop.f32.mrb[0].mxu0
        %v552 = vadd.f32 0.0, %v551
        %v553 = vpop.f32.mrb[0].mxu0
        %554 = vdwg.mxu0
        %v555 = vmul.f32 %v329, %v451
        %v556 = vmul.f32 %v334, %v453
        %v557 = vmul.f32 %v339, %v455
        %v558 = vmul.f32 %v344, %v457
        %v560 = vsel %vm356, %v555, 0
        %v563 = vsel %vm356, %v556, 0
        %v566 = vsel %vm356, %v557, 0
        %v569 = vsel %vm356, %v558, 0
        %571 = vmatprep.subr.mxu0 0.0
        %572 = vmatpush1.msra.mxu0 %v244
        %573 = vmatprep.subr.mxu0 0.0
        %574 = vmatpush1.msra.mxu0 %v245
        %575 = vmatprep.subr.mxu0 0.0
        %576 = vmatpush1.msra.mxu0 %v246
        %577 = vmatprep.subr.mxu0 0.0
        %578 = vmatpush1.msra.mxu0 %v247
        %579 = vmatprep.subr.mxu0 0.0
        %580 = vmatpush1.msra.mxu0 0.0
        %581 = vmatprep.subr.mxu0 0.0
        %582 = vmatpush1.msra.mxu0 0.0
        %583 = vmatprep.subr.mxu0 0.0
        %584 = vmatpush1.msra.mxu0 0.0
        %585 = vmatprep.subr.mxu0 0.0
        %586 = vmatpush1.msra.mxu0 0.0
        %587 = vmatprep.subr.mxu0 0.0
        %588 = vmatpush1.msra.mxu0 0.0
        %589 = vmatprep.subr.mxu0 0.0
        %590 = vmatpush1.msra.mxu0 0.0
        %591 = vmatprep.subr.mxu0 0.0
        %592 = vmatpush1.msra.mxu0 0.0
        %593 = vmatprep.subr.mxu0 0.0
        %594 = vmatpush1.msra.mxu0 0.0
        %595 = vmatprep.subr.mxu0 0.0
        %596 = vmatpush1.msra.mxu0 0.0
        %597 = vmatprep.subr.mxu0 0.0
        %598 = vmatpush1.msra.mxu0 0.0
        %599 = vmatprep.subr.mxu0 0.0
        %600 = vmatpush1.msra.mxu0 0.0
        %601 = vmatprep.subr.mxu0 0.0
        %602 = vmatpush1.msra.mxu0 0.0
        %603 = vmatprep.subr.mxu0 0.0
        %604 = vmatpush1.msra.mxu0 0.0
        %605 = vmatprep.subr.mxu0 0.0
        %606 = vmatpush1.msra.mxu0 0.0
        %607 = vmatprep.subr.mxu0 0.0
        %608 = vmatpush1.msra.mxu0 0.0
        %609 = vmatprep.subr.mxu0 0.0
        %610 = vmatpush1.msra.mxu0 0.0
        %611 = vmatprep.subr.mxu0 0.0
        %612 = vmatpush1.msra.mxu0 0.0
        %613 = vmatprep.subr.mxu0 0.0
        %614 = vmatpush1.msra.mxu0 0.0
        %615 = vmatprep.subr.mxu0 0.0
        %616 = vmatpush1.msra.mxu0 0.0
        %617 = vmatprep.subr.mxu0 0.0
        %618 = vmatpush1.msra.mxu0 0.0
        %619 = vmatprep.subr.mxu0 0.0
        %620 = vmatpush1.msra.mxu0 0.0
        %621 = vmatprep.subr.mxu0 0.0
        %622 = vmatpush1.msra.mxu0 0.0
        %623 = vmatprep.subr.mxu0 0.0
        %624 = vmatpush1.msra.mxu0 0.0
        %625 = vmatprep.subr.mxu0 0.0
        %626 = vmatpush1.msra.mxu0 0.0
        %627 = vmatprep.subr.mxu0 0.0
        %628 = vmatpush1.msra.mxu0 0.0
        %629 = vmatprep.subr.mxu0 0.0
        %630 = vmatpush1.msra.mxu0 0.0
        %631 = vmatprep.subr.mxu0 0.0
        %632 = vmatpush1.msra.mxu0 0.0
        %633 = vmatprep.subr.mxu0 0.0
        %634 = vmatpush1.msra.mxu0 0.0
        %635 = vmatprep.mubr.f32.mxu0 0.0
        %636 = vmatmul.mubr.f32.gmra.mrb[0].mxu0 %v560
        %v637 = vpop.f32.mrb[0].mxu0
        %v638 = vadd.f32 0.0, %v637
        %v639 = vpop.f32.mrb[0].mxu0
        %640 = vmatprep.mubr.f32.mxu0 0.0
        %641 = vmatmul.mubr.f32.gmra.mrb[0].mxu0 %v563
        %v642 = vpop.f32.mrb[0].mxu0
        %v643 = vadd.f32 0.0, %v642
        %v644 = vpop.f32.mrb[0].mxu0
        %645 = vmatprep.mubr.f32.mxu0 0.0
        %646 = vmatmul.mubr.f32.gmra.mrb[0].mxu0 %v566
        %v647 = vpop.f32.mrb[0].mxu0
        %v648 = vadd.f32 0.0, %v647
        %v649 = vpop.f32.mrb[0].mxu0
        %650 = vmatprep.mubr.f32.mxu0 0.0
        %651 = vmatmul.mubr.f32.gmra.mrb[0].mxu0 %v569
        %v652 = vpop.f32.mrb[0].mxu0
        %v653 = vadd.f32 0.0, %v652
        %v654 = vpop.f32.mrb[0].mxu0
        %655 = vdwg.mxu0
        %v656 = vrcp.pop %v537
        %v657 = vmul.f32 %v638, %v656
        %v658 = vrcp.pop %v542
        %v659 = vmul.f32 %v643, %v658
        %v660 = vrcp.pop %v547
        %v661 = vmul.f32 %v648, %v660
        %v662 = vrcp.pop %v552
        %v663 = vmul.f32 %v653, %v662
        %vm664 = vcmp.eq.f32.partialorder %v329, 0.0
        %vm665 = vcmp.eq.f32.partialorder %v334, 0.0
        %vm666 = vcmp.eq.f32.partialorder %v339, 0.0
        %vm667 = vcmp.eq.f32.partialorder %v344, 0.0
        %v668 = vsel %vm664, -inf, %v329
        %v669 = vsel %vm665, -inf, %v334
        %v670 = vsel %vm666, -inf, %v339
        %v671 = vsel %vm667, -inf, %v344
        %v672 = vlaneseq
        %v673 = vshrl.u32 %v672, 7
        %v674 = vadd.s32 %v673, 8
        %v675 = vadd.s32 %v673, 16
        %v676 = vadd.s32 %v673, 24
        %vm677 = vcmp.ge.s32.totalorder %v673, 0
        %vm678 = vcmp.ge.s32.totalorder %v674, 0
        %vm679 = vcmp.ge.s32.totalorder %v675, 0
        %vm680 = vcmp.ge.s32.totalorder %v676, 0
        %vm681 = vcmp.lt.s32.totalorder %v673, 8
        %vm682 = vcmp.lt.s32.totalorder %v674, 8
        %vm683 = vcmp.lt.s32.totalorder %v675, 8
        %vm684 = vcmp.lt.s32.totalorder %v676, 8
        %vm685 = vmand %vm677, %vm681
        %vm686 = vmand %vm678, %vm682
        %vm687 = vmand %vm679, %vm683
        %vm688 = vmand %vm680, %vm684
        %v689 = vsel %vm685, %v668, -inf
        %v690 = vsel %vm686, %v669, -inf
        %v691 = vsel %vm687, %v670, -inf
        %v692 = vsel %vm688, %v671, -inf
        %v693 = vsel %vm356, %v689, -inf
        %v694 = vsel %vm356, %v690, -inf
        %v695 = vsel %vm356, %v691, -inf
        %v696 = vsel %vm356, %v692, -inf
        %v697 = vmax.f32 %v693, %v694
        %v698 = vmax.f32 %v695, %v696
        %v699 = vmax.f32 %v697, %v698
        %v700 = vrot.slane %v699, 4
        %v701 = vmax.f32 %v699, %v700
        %v702 = vrot.slane %v701, 2
        %v703 = vmax.f32 %v701, %v702
        %v704 = vrot.slane %v703, 1
        %v705 = vmax.f32 %v703, %v704
        %v706 = vsel %vm685, %v705, -inf
        %v707 = vsel %vm686, %v705, -inf
        %v708 = vsel %vm687, %v705, -inf
        %v709 = vsel %vm688, %v705, -inf
        %vm710 = vcmp.ge.s32.totalorder %v673, 8
        %vm711 = vcmp.ge.s32.totalorder %v674, 8
        %vm712 = vcmp.ge.s32.totalorder %v675, 8
        %vm713 = vcmp.ge.s32.totalorder %v676, 8
        %vm714 = vcmp.lt.s32.totalorder %v673, 16
        %vm715 = vcmp.lt.s32.totalorder %v674, 16
        %vm716 = vcmp.lt.s32.totalorder %v675, 16
        %vm717 = vcmp.lt.s32.totalorder %v676, 16
        %vm718 = vmand %vm710, %vm714
        %vm719 = vmand %vm711, %vm715
        %vm720 = vmand %vm712, %vm716
        %vm721 = vmand %vm713, %vm717
        %v722 = vsel %vm718, %v668, -inf
        %v723 = vsel %vm719, %v669, -inf
        %v724 = vsel %vm720, %v670, -inf
        %v725 = vsel %vm721, %v671, -inf
        %v726 = vsel %vm356, %v722, -inf
        %v727 = vsel %vm356, %v723, -inf
        %v728 = vsel %vm356, %v724, -inf
        %v729 = vsel %vm356, %v725, -inf
        %v730 = vmax.f32 %v726, %v727
        %v731 = vmax.f32 %v728, %v729
        %v732 = vmax.f32 %v730, %v731
        %v733 = vrot.slane %v732, 4
        %v734 = vmax.f32 %v732, %v733
        %v735 = vrot.slane %v734, 2
        %v736 = vmax.f32 %v734, %v735
        %v737 = vrot.slane %v736, 1
        %v738 = vmax.f32 %v736, %v737
        %v739 = vsel %vm718, %v738, %v706
        %v740 = vsel %vm719, %v738, %v707
        %v741 = vsel %vm720, %v738, %v708
        %v742 = vsel %vm721, %v738, %v709
        %vm743 = vcmp.ge.s32.totalorder %v673, 16
        %vm744 = vcmp.ge.s32.totalorder %v674, 16
        %vm745 = vcmp.ge.s32.totalorder %v675, 16
        %vm746 = vcmp.ge.s32.totalorder %v676, 16
        %vm747 = vcmp.lt.s32.totalorder %v673, 24
        %vm748 = vcmp.lt.s32.totalorder %v674, 24
        %vm749 = vcmp.lt.s32.totalorder %v675, 24
        %vm750 = vcmp.lt.s32.totalorder %v676, 24
        %vm751 = vmand %vm743, %vm747
        %vm752 = vmand %vm744, %vm748
        %vm753 = vmand %vm745, %vm749
        %vm754 = vmand %vm746, %vm750
        %v755 = vsel %vm751, %v668, -inf
        %v756 = vsel %vm752, %v669, -inf
        %v757 = vsel %vm753, %v670, -inf
        %v758 = vsel %vm754, %v671, -inf
        %v759 = vsel %vm356, %v755, -inf
        %v760 = vsel %vm356, %v756, -inf
        %v761 = vsel %vm356, %v757, -inf
        %v762 = vsel %vm356, %v758, -inf
        %v763 = vmax.f32 %v759, %v760
        %v764 = vmax.f32 %v761, %v762
        %v765 = vmax.f32 %v763, %v764
        %v766 = vrot.slane %v765, 4
        %v767 = vmax.f32 %v765, %v766
        %v768 = vrot.slane %v767, 2
        %v769 = vmax.f32 %v767, %v768
        %v770 = vrot.slane %v769, 1
        %v771 = vmax.f32 %v769, %v770
        %v772 = vsel %vm751, %v771, %v739
        %v773 = vsel %vm752, %v771, %v740
        %v774 = vsel %vm753, %v771, %v741
        %v775 = vsel %vm754, %v771, %v742
        %vm776 = vcmp.ge.s32.totalorder %v673, 24
        %vm777 = vcmp.ge.s32.totalorder %v674, 24
        %vm778 = vcmp.ge.s32.totalorder %v675, 24
        %vm779 = vcmp.ge.s32.totalorder %v676, 24
        %vm780 = vcmp.lt.s32.totalorder %v673, 32
        %vm781 = vcmp.lt.s32.totalorder %v674, 32
        %vm782 = vcmp.lt.s32.totalorder %v675, 32
        %vm783 = vcmp.lt.s32.totalorder %v676, 32
        %vm784 = vmand %vm776, %vm780
        %vm785 = vmand %vm777, %vm781
        %vm786 = vmand %vm778, %vm782
        %vm787 = vmand %vm779, %vm783
        %v788 = vsel %vm784, %v668, -inf
        %v789 = vsel %vm785, %v669, -inf
        %v790 = vsel %vm786, %v670, -inf
        %v791 = vsel %vm787, %v671, -inf
        %v792 = vsel %vm356, %v788, -inf
        %v793 = vsel %vm356, %v789, -inf
        %v794 = vsel %vm356, %v790, -inf
        %v795 = vsel %vm356, %v791, -inf
        %v796 = vmax.f32 %v792, %v793
        %v797 = vmax.f32 %v794, %v795
        %v798 = vmax.f32 %v796, %v797
        %v799 = vrot.slane %v798, 4
        %v800 = vmax.f32 %v798, %v799
        %v801 = vrot.slane %v800, 2
        %v802 = vmax.f32 %v800, %v801
        %v803 = vrot.slane %v802, 1
        %v804 = vmax.f32 %v802, %v803
        %v805 = vsel %vm784, %v804, %v772
        %v806 = vsel %vm785, %v804, %v773
        %v807 = vsel %vm786, %v804, %v774
        %v808 = vsel %vm787, %v804, %v775
        %v809 = vsub.f32 %v668, %v805
        %v810 = vsub.f32 %v669, %v806
        %v811 = vsub.f32 %v670, %v807
        %v812 = vsub.f32 %v671, %v808
        %v813 = vmul.f32 %v809, 100.0
        %v814 = vmul.f32 %v810, 100.0
        %v815 = vmul.f32 %v811, 100.0
        %v816 = vmul.f32 %v812, 100.0
        %v817 = vmul.f32 %v813, 1.442695
        %v818 = vpow.pop %v817
        %v819 = vmul.f32 %v814, 1.442695
        %v820 = vpow.pop %v819
        %v821 = vmul.f32 %v815, 1.442695
        %v822 = vpow.pop %v821
        %v823 = vmul.f32 %v816, 1.442695
        %v824 = vpow.pop %v823
        %v826 = vsel %vm356, %v248, 0
        %828 = vmatprep.subr.mxu0 0.0
        %829 = vmatpush1.msra.mxu0 %v818
        %830 = vmatprep.subr.mxu0 0.0
        %831 = vmatpush1.msra.mxu0 %v820
        %832 = vmatprep.subr.mxu0 0.0
        %833 = vmatpush1.msra.mxu0 %v822
        %834 = vmatprep.subr.mxu0 0.0
        %835 = vmatpush1.msra.mxu0 %v824
        %836 = vmatprep.subr.mxu0 0.0
        %837 = vmatpush1.msra.mxu0 0.0
        %838 = vmatprep.subr.mxu0 0.0
        %839 = vmatpush1.msra.mxu0 0.0
        %840 = vmatprep.subr.mxu0 0.0
        %841 = vmatpush1.msra.mxu0 0.0
        %842 = vmatprep.subr.mxu0 0.0
        %843 = vmatpush1.msra.mxu0 0.0
        %844 = vmatprep.subr.mxu0 0.0
        %845 = vmatpush1.msra.mxu0 0.0
        %846 = vmatprep.subr.mxu0 0.0
        %847 = vmatpush1.msra.mxu0 0.0
        %848 = vmatprep.subr.mxu0 0.0
        %849 = vmatpush1.msra.mxu0 0.0
        %850 = vmatprep.subr.mxu0 0.0
        %851 = vmatpush1.msra.mxu0 0.0
        %852 = vmatprep.subr.mxu0 0.0
        %853 = vmatpush1.msra.mxu0 0.0
        %854 = vmatprep.subr.mxu0 0.0
        %855 = vmatpush1.msra.mxu0 0.0
        %856 = vmatprep.subr.mxu0 0.0
        %857 = vmatpush1.msra.mxu0 0.0
        %858 = vmatprep.subr.mxu0 0.0
        %859 = vmatpush1.msra.mxu0 0.0
        %860 = vmatprep.subr.mxu0 0.0
        %861 = vmatpush1.msra.mxu0 0.0
        %862 = vmatprep.subr.mxu0 0.0
        %863 = vmatpush1.msra.mxu0 0.0
        %864 = vmatprep.subr.mxu0 0.0
        %865 = vmatpush1.msra.mxu0 0.0
        %866 = vmatprep.subr.mxu0 0.0
        %867 = vmatpush1.msra.mxu0 0.0
        %868 = vmatprep.subr.mxu0 0.0
        %869 = vmatpush1.msra.mxu0 0.0
        %870 = vmatprep.subr.mxu0 0.0
        %871 = vmatpush1.msra.mxu0 0.0
        %872 = vmatprep.subr.mxu0 0.0
        %873 = vmatpush1.msra.mxu0 0.0
        %874 = vmatprep.subr.mxu0 0.0
        %875 = vmatpush1.msra.mxu0 0.0
        %876 = vmatprep.subr.mxu0 0.0
        %877 = vmatpush1.msra.mxu0 0.0
        %878 = vmatprep.subr.mxu0 0.0
        %879 = vmatpush1.msra.mxu0 0.0
        %880 = vmatprep.subr.mxu0 0.0
        %881 = vmatpush1.msra.mxu0 0.0
        %882 = vmatprep.subr.mxu0 0.0
        %883 = vmatpush1.msra.mxu0 0.0
        %884 = vmatprep.subr.mxu0 0.0
        %885 = vmatpush1.msra.mxu0 0.0
        %886 = vmatprep.subr.mxu0 0.0
        %887 = vmatpush1.msra.mxu0 0.0
        %888 = vmatprep.subr.mxu0 0.0
        %889 = vmatpush1.msra.mxu0 0.0
        %890 = vmatprep.subr.mxu0 0.0
        %891 = vmatpush1.msra.mxu0 0.0
        %892 = vmatprep.mubr.f32.mxu0 0.0
        %893 = vmatmul.mubr.f32.gmra.mrb[0].mxu0 %v826
        %v894 = vpop.f32.mrb[0].mxu0
        %v895 = vadd.f32 0.0, %v894
        %v896 = vpop.f32.mrb[0].mxu0
        %897 = vdwg.mxu0
        %v898 = vmul.f32 %v329, %v818
        %v899 = vmul.f32 %v334, %v820
        %v900 = vmul.f32 %v339, %v822
        %v901 = vmul.f32 %v344, %v824
        %902 = vmatprep.subr.mxu0 0.0
        %903 = vmatpush1.msra.mxu0 %v898
        %904 = vmatprep.subr.mxu0 0.0
        %905 = vmatpush1.msra.mxu0 %v899
        %906 = vmatprep.subr.mxu0 0.0
        %907 = vmatpush1.msra.mxu0 %v900
        %908 = vmatprep.subr.mxu0 0.0
        %909 = vmatpush1.msra.mxu0 %v901
        %910 = vmatprep.subr.mxu0 0.0
        %911 = vmatpush1.msra.mxu0 0.0
        %912 = vmatprep.subr.mxu0 0.0
        %913 = vmatpush1.msra.mxu0 0.0
        %914 = vmatprep.subr.mxu0 0.0
        %915 = vmatpush1.msra.mxu0 0.0
        %916 = vmatprep.subr.mxu0 0.0
        %917 = vmatpush1.msra.mxu0 0.0
        %918 = vmatprep.subr.mxu0 0.0
        %919 = vmatpush1.msra.mxu0 0.0
        %920 = vmatprep.subr.mxu0 0.0
        %921 = vmatpush1.msra.mxu0 0.0
        %922 = vmatprep.subr.mxu0 0.0
        %923 = vmatpush1.msra.mxu0 0.0
        %924 = vmatprep.subr.mxu0 0.0
        %925 = vmatpush1.msra.mxu0 0.0
        %926 = vmatprep.subr.mxu0 0.0
        %927 = vmatpush1.msra.mxu0 0.0
        %928 = vmatprep.subr.mxu0 0.0
        %929 = vmatpush1.msra.mxu0 0.0
        %930 = vmatprep.subr.mxu0 0.0
        %931 = vmatpush1.msra.mxu0 0.0
        %932 = vmatprep.subr.mxu0 0.0
        %933 = vmatpush1.msra.mxu0 0.0
        %934 = vmatprep.subr.mxu0 0.0
        %935 = vmatpush1.msra.mxu0 0.0
        %936 = vmatprep.subr.mxu0 0.0
        %937 = vmatpush1.msra.mxu0 0.0
        %938 = vmatprep.subr.mxu0 0.0
        %939 = vmatpush1.msra.mxu0 0.0
        %940 = vmatprep.subr.mxu0 0.0
        %941 = vmatpush1.msra.mxu0 0.0
        %942 = vmatprep.subr.mxu0 0.0
        %943 = vmatpush1.msra.mxu0 0.0
        %944 = vmatprep.subr.mxu0 0.0
        %945 = vmatpush1.msra.mxu0 0.0
        %946 = vmatprep.subr.mxu0 0.0
        %947 = vmatpush1.msra.mxu0 0.0
        %948 = vmatprep.subr.mxu0 0.0
        %949 = vmatpush1.msra.mxu0 0.0
        %950 = vmatprep.subr.mxu0 0.0
        %951 = vmatpush1.msra.mxu0 0.0
        %952 = vmatprep.subr.mxu0 0.0
        %953 = vmatpush1.msra.mxu0 0.0
        %954 = vmatprep.subr.mxu0 0.0
        %955 = vmatpush1.msra.mxu0 0.0
        %956 = vmatprep.subr.mxu0 0.0
        %957 = vmatpush1.msra.mxu0 0.0
        %958 = vmatprep.subr.mxu0 0.0
        %959 = vmatpush1.msra.mxu0 0.0
        %960 = vmatprep.subr.mxu0 0.0
        %961 = vmatpush1.msra.mxu0 0.0
        %962 = vmatprep.subr.mxu0 0.0
        %963 = vmatpush1.msra.mxu0 0.0
        %964 = vmatprep.subr.mxu0 0.0
        %965 = vmatpush1.msra.mxu0 0.0
        %966 = vmatprep.mubr.f32.mxu0 0.0
        %967 = vmatmul.mubr.f32.gmra.mrb[0].mxu0 %v826
        %v968 = vpop.f32.mrb[0].mxu0
        %v969 = vadd.f32 0.0, %v968
        %v970 = vpop.f32.mrb[0].mxu0
        %971 = vdwg.mxu0
        %v972 = vrcp.pop %v895
        %v973 = vmul.f32 %v969, %v972
        %vm974 = vcmp.eq.f32.partialorder %v657, 0.0
        %vm975 = vcmp.eq.f32.partialorder %v659, 0.0
        %vm976 = vcmp.eq.f32.partialorder %v661, 0.0
        %vm977 = vcmp.eq.f32.partialorder %v663, 0.0
        %v978 = vsel %vm974, -inf, %v657
        %v979 = vsel %vm975, -inf, %v659
        %v980 = vsel %vm976, -inf, %v661
        %v981 = vsel %vm977, -inf, %v663
        %v982 = vsel %vm685, %v978, -inf
        %v983 = vsel %vm686, %v979, -inf
        %v984 = vsel %vm687, %v980, -inf
        %v985 = vsel %vm688, %v981, -inf
        %vm986 = vcmask 31744
        %v987 = vsel %vm986, %v982, -inf
        %v988 = vsel %vm986, %v983, -inf
        %v989 = vsel %vm986, %v984, -inf
        %v990 = vsel %vm986, %v985, -inf
        %v991 = vmax.f32 %v987, %v988
        %v992 = vmax.f32 %v989, %v990
        %v993 = vmax.f32 %v991, %v992
        %v994 = vrot.slane %v993, 4
        %v995 = vmax.f32 %v993, %v994
        %v996 = vrot.slane %v995, 2
        %v997 = vmax.f32 %v995, %v996
        %v998 = vrot.slane %v997, 1
        %v999 = vmax.f32 %v997, %v998
        %v1000 = vsel %vm685, %v999, -inf
        %v1001 = vsel %vm686, %v999, -inf
        %v1002 = vsel %vm687, %v999, -inf
        %v1003 = vsel %vm688, %v999, -inf
        %v1004 = vsel %vm718, %v978, -inf
        %v1005 = vsel %vm719, %v979, -inf
        %v1006 = vsel %vm720, %v980, -inf
        %v1007 = vsel %vm721, %v981, -inf
        %v1008 = vsel %vm986, %v1004, -inf
        %v1009 = vsel %vm986, %v1005, -inf
        %v1010 = vsel %vm986, %v1006, -inf
        %v1011 = vsel %vm986, %v1007, -inf
        %v1012 = vmax.f32 %v1008, %v1009
        %v1013 = vmax.f32 %v1010, %v1011
        %v1014 = vmax.f32 %v1012, %v1013
        %v1015 = vrot.slane %v1014, 4
        %v1016 = vmax.f32 %v1014, %v1015
        %v1017 = vrot.slane %v1016, 2
        %v1018 = vmax.f32 %v1016, %v1017
        %v1019 = vrot.slane %v1018, 1
        %v1020 = vmax.f32 %v1018, %v1019
        %v1021 = vsel %vm718, %v1020, %v1000
        %v1022 = vsel %vm719, %v1020, %v1001
        %v1023 = vsel %vm720, %v1020, %v1002
        %v1024 = vsel %vm721, %v1020, %v1003
        %v1025 = vsel %vm751, %v978, -inf
        %v1026 = vsel %vm752, %v979, -inf
        %v1027 = vsel %vm753, %v980, -inf
        %v1028 = vsel %vm754, %v981, -inf
        %v1029 = vsel %vm986, %v1025, -inf
        %v1030 = vsel %vm986, %v1026, -inf
        %v1031 = vsel %vm986, %v1027, -inf
        %v1032 = vsel %vm986, %v1028, -inf
        %v1033 = vmax.f32 %v1029, %v1030
        %v1034 = vmax.f32 %v1031, %v1032
        %v1035 = vmax.f32 %v1033, %v1034
        %v1036 = vrot.slane %v1035, 4
        %v1037 = vmax.f32 %v1035, %v1036
        %v1038 = vrot.slane %v1037, 2
        %v1039 = vmax.f32 %v1037, %v1038
        %v1040 = vrot.slane %v1039, 1
        %v1041 = vmax.f32 %v1039, %v1040
        %v1042 = vsel %vm751, %v1041, %v1021
        %v1043 = vsel %vm752, %v1041, %v1022
        %v1044 = vsel %vm753, %v1041, %v1023
        %v1045 = vsel %vm754, %v1041, %v1024
        %v1046 = vsel %vm784, %v978, -inf
        %v1047 = vsel %vm785, %v979, -inf
        %v1048 = vsel %vm786, %v980, -inf
        %v1049 = vsel %vm787, %v981, -inf
        %v1050 = vsel %vm986, %v1046, -inf
        %v1051 = vsel %vm986, %v1047, -inf
        %v1052 = vsel %vm986, %v1048, -inf
        %v1053 = vsel %vm986, %v1049, -inf
        %v1054 = vmax.f32 %v1050, %v1051
        %v1055 = vmax.f32 %v1052, %v1053
        %v1056 = vmax.f32 %v1054, %v1055
        %v1057 = vrot.slane %v1056, 4
        %v1058 = vmax.f32 %v1056, %v1057
        %v1059 = vrot.slane %v1058, 2
        %v1060 = vmax.f32 %v1058, %v1059
        %v1061 = vrot.slane %v1060, 1
        %v1062 = vmax.f32 %v1060, %v1061
        %v1063 = vsel %vm784, %v1062, %v1042
        %v1064 = vsel %vm785, %v1062, %v1043
        %v1065 = vsel %vm786, %v1062, %v1044
        %v1066 = vsel %vm787, %v1062, %v1045
        %v1067 = vsub.f32 %v978, %v1063
        %v1068 = vsub.f32 %v979, %v1064
        %v1069 = vsub.f32 %v980, %v1065
        %v1070 = vsub.f32 %v981, %v1066
        %v1071 = vmul.f32 %v1067, 100.0
        %v1072 = vmul.f32 %v1068, 100.0
        %v1073 = vmul.f32 %v1069, 100.0
        %v1074 = vmul.f32 %v1070, 100.0
        %v1075 = vmul.f32 %v1071, 1.442695
        %v1076 = vpow.pop %v1075
        %v1077 = vmul.f32 %v1072, 1.442695
        %v1078 = vpow.pop %v1077
        %v1079 = vmul.f32 %v1073, 1.442695
        %v1080 = vpow.pop %v1079
        %v1081 = vmul.f32 %v1074, 1.442695
        %v1082 = vpow.pop %v1081
        %1083 = vmatprep.subr.mxu0 0.0
        %1084 = vmatpush1.msra.mxu0 %v1076
        %1085 = vmatprep.subr.mxu0 0.0
        %1086 = vmatpush1.msra.mxu0 %v1078
        %1087 = vmatprep.subr.mxu0 0.0
        %1088 = vmatpush1.msra.mxu0 %v1080
        %1089 = vmatprep.subr.mxu0 0.0
        %1090 = vmatpush1.msra.mxu0 %v1082
        %1091 = vmatprep.subr.mxu0 0.0
        %1092 = vmatpush1.msra.mxu0 0.0
        %1093 = vmatprep.subr.mxu0 0.0
        %1094 = vmatpush1.msra.mxu0 0.0
        %1095 = vmatprep.subr.mxu0 0.0
        %1096 = vmatpush1.msra.mxu0 0.0
        %1097 = vmatprep.subr.mxu0 0.0
        %1098 = vmatpush1.msra.mxu0 0.0
        %1099 = vmatprep.subr.mxu0 0.0
        %1100 = vmatpush1.msra.mxu0 0.0
        %1101 = vmatprep.subr.mxu0 0.0
        %1102 = vmatpush1.msra.mxu0 0.0
        %1103 = vmatprep.subr.mxu0 0.0
        %1104 = vmatpush1.msra.mxu0 0.0
        %1105 = vmatprep.subr.mxu0 0.0
        %1106 = vmatpush1.msra.mxu0 0.0
        %1107 = vmatprep.subr.mxu0 0.0
        %1108 = vmatpush1.msra.mxu0 0.0
        %1109 = vmatprep.subr.mxu0 0.0
        %1110 = vmatpush1.msra.mxu0 0.0
        %1111 = vmatprep.subr.mxu0 0.0
        %1112 = vmatpush1.msra.mxu0 0.0
        %1113 = vmatprep.subr.mxu0 0.0
        %1114 = vmatpush1.msra.mxu0 0.0
        %1115 = vmatprep.subr.mxu0 0.0
        %1116 = vmatpush1.msra.mxu0 0.0
        %1117 = vmatprep.subr.mxu0 0.0
        %1118 = vmatpush1.msra.mxu0 0.0
        %1119 = vmatprep.subr.mxu0 0.0
        %1120 = vmatpush1.msra.mxu0 0.0
        %1121 = vmatprep.subr.mxu0 0.0
        %1122 = vmatpush1.msra.mxu0 0.0
        %1123 = vmatprep.subr.mxu0 0.0
        %1124 = vmatpush1.msra.mxu0 0.0
        %1125 = vmatprep.subr.mxu0 0.0
        %1126 = vmatpush1.msra.mxu0 0.0
        %1127 = vmatprep.subr.mxu0 0.0
        %1128 = vmatpush1.msra.mxu0 0.0
        %1129 = vmatprep.subr.mxu0 0.0
        %1130 = vmatpush1.msra.mxu0 0.0
        %1131 = vmatprep.subr.mxu0 0.0
        %1132 = vmatpush1.msra.mxu0 0.0
        %1133 = vmatprep.subr.mxu0 0.0
        %1134 = vmatpush1.msra.mxu0 0.0
        %1135 = vmatprep.subr.mxu0 0.0
        %1136 = vmatpush1.msra.mxu0 0.0
        %1137 = vmatprep.subr.mxu0 0.0
        %1138 = vmatpush1.msra.mxu0 0.0
        %1139 = vmatprep.subr.mxu0 0.0
        %1140 = vmatpush1.msra.mxu0 0.0
        %1141 = vmatprep.subr.mxu0 0.0
        %1142 = vmatpush1.msra.mxu0 0.0
        %1143 = vmatprep.subr.mxu0 0.0
        %1144 = vmatpush1.msra.mxu0 0.0
        %1145 = vmatprep.subr.mxu0 0.0
        %1146 = vmatpush1.msra.mxu0 0.0
        %1147 = vmatprep.mubr.f32.mxu0 0.0
        %1148 = vmatmul.mubr.f32.gmra.mrb[0].mxu0 %v826
        %v1149 = vpop.f32.mrb[0].mxu0
        %v1150 = vadd.f32 0.0, %v1149
        %v1151 = vpop.f32.mrb[0].mxu0
        %1152 = vdwg.mxu0
        %v1153 = vmul.f32 %v657, %v1076
        %v1154 = vmul.f32 %v659, %v1078
        %v1155 = vmul.f32 %v661, %v1080
        %v1156 = vmul.f32 %v663, %v1082
        %1157 = vmatprep.subr.mxu0 0.0
        %1158 = vmatpush1.msra.mxu0 %v1153
        %1159 = vmatprep.subr.mxu0 0.0
        %1160 = vmatpush1.msra.mxu0 %v1154
        %1161 = vmatprep.subr.mxu0 0.0
        %1162 = vmatpush1.msra.mxu0 %v1155
        %1163 = vmatprep.subr.mxu0 0.0
        %1164 = vmatpush1.msra.mxu0 %v1156
        %1165 = vmatprep.subr.mxu0 0.0
        %1166 = vmatpush1.msra.mxu0 0.0
        %1167 = vmatprep.subr.mxu0 0.0
        %1168 = vmatpush1.msra.mxu0 0.0
        %1169 = vmatprep.subr.mxu0 0.0
        %1170 = vmatpush1.msra.mxu0 0.0
        %1171 = vmatprep.subr.mxu0 0.0
        %1172 = vmatpush1.msra.mxu0 0.0
        %1173 = vmatprep.subr.mxu0 0.0
        %1174 = vmatpush1.msra.mxu0 0.0
        %1175 = vmatprep.subr.mxu0 0.0
        %1176 = vmatpush1.msra.mxu0 0.0
        %1177 = vmatprep.subr.mxu0 0.0
        %1178 = vmatpush1.msra.mxu0 0.0
        %1179 = vmatprep.subr.mxu0 0.0
        %1180 = vmatpush1.msra.mxu0 0.0
        %1181 = vmatprep.subr.mxu0 0.0
        %1182 = vmatpush1.msra.mxu0 0.0
        %1183 = vmatprep.subr.mxu0 0.0
        %1184 = vmatpush1.msra.mxu0 0.0
        %1185 = vmatprep.subr.mxu0 0.0
        %1186 = vmatpush1.msra.mxu0 0.0
        %1187 = vmatprep.subr.mxu0 0.0
        %1188 = vmatpush1.msra.mxu0 0.0
        %1189 = vmatprep.subr.mxu0 0.0
        %1190 = vmatpush1.msra.mxu0 0.0
        %1191 = vmatprep.subr.mxu0 0.0
        %1192 = vmatpush1.msra.mxu0 0.0
        %1193 = vmatprep.subr.mxu0 0.0
        %1194 = vmatpush1.msra.mxu0 0.0
        %1195 = vmatprep.subr.mxu0 0.0
        %1196 = vmatpush1.msra.mxu0 0.0
        %1197 = vmatprep.subr.mxu0 0.0
        %1198 = vmatpush1.msra.mxu0 0.0
        %1199 = vmatprep.subr.mxu0 0.0
        %1200 = vmatpush1.msra.mxu0 0.0
        %1201 = vmatprep.subr.mxu0 0.0
        %1202 = vmatpush1.msra.mxu0 0.0
        %1203 = vmatprep.subr.mxu0 0.0
        %1204 = vmatpush1.msra.mxu0 0.0
        %1205 = vmatprep.subr.mxu0 0.0
        %1206 = vmatpush1.msra.mxu0 0.0
        %1207 = vmatprep.subr.mxu0 0.0
        %1208 = vmatpush1.msra.mxu0 0.0
        %1209 = vmatprep.subr.mxu0 0.0
        %1210 = vmatpush1.msra.mxu0 0.0
        %1211 = vmatprep.subr.mxu0 0.0
        %1212 = vmatpush1.msra.mxu0 0.0
        %1213 = vmatprep.subr.mxu0 0.0
        %1214 = vmatpush1.msra.mxu0 0.0
        %1215 = vmatprep.subr.mxu0 0.0
        %1216 = vmatpush1.msra.mxu0 0.0
        %1217 = vmatprep.subr.mxu0 0.0
        %1218 = vmatpush1.msra.mxu0 0.0
        %1219 = vmatprep.subr.mxu0 0.0
        %1220 = vmatpush1.msra.mxu0 0.0
        %1221 = vmatprep.mubr.f32.mxu0 0.0
        %1222 = vmatmul.mubr.f32.gmra.mrb[0].mxu0 %v826
        %v1223 = vpop.f32.mrb[0].mxu0
        %v1224 = vadd.f32 0.0, %v1223
        %v1225 = vpop.f32.mrb[0].mxu0
        %1226 = vdwg.mxu0
        %v1227 = vrcp.pop %v1150
        %v1228 = vmul.f32 %v1224, %v1227
        %v1229 = vsel %vm351, %v973, -inf
        %vm1230 = vcmask 257024
        %v1231 = vsel %vm1230, %v1229, -inf
        %1232 = vmax.xlane.f32.xlu0 %v1231
        %v1233 = vpop.xlane.xlu0 %1232
        %v1234 = vsel %vm351, %v1233, -inf
        %v1235 = vsel %vm375, %v973, -inf
        %v1236 = vsel %vm1230, %v1235, -inf
        %1237 = vmax.xlane.f32.xlu0 %v1236
        %v1238 = vpop.xlane.xlu0 %1237
        %v1239 = vsel %vm375, %v1238, %v1234
        %v1240 = vsel %vm398, %v973, -inf
        %v1241 = vsel %vm1230, %v1240, -inf
        %1242 = vmax.xlane.f32.xlu0 %v1241
        %v1243 = vpop.xlane.xlu0 %1242
        %v1244 = vsel %vm398, %v1243, %v1239
        %v1245 = vsel %vm421, %v973, -inf
        %v1246 = vsel %vm1230, %v1245, -inf
        %1247 = vmax.xlane.f32.xlu0 %v1246
        %v1248 = vpop.xlane.xlu0 %1247
        %v1249 = vsel %vm421, %v1248, %v1244
        %v1250 = vsub.f32 %v973, %v1249
        %v1251 = vmul.f32 %v1250, 100.0
        %v1252 = vmul.f32 %v1251, 1.442695
        %v1253 = vpow.pop %v1252
        %v1255 = vsel %vm356, %v1253, 0
        %1257 = vmatprep.subr.mxu0 0.0
        %1258 = vmatpush1.msra.mxu0 %v244
        %1259 = vmatprep.subr.mxu0 0.0
        %1260 = vmatpush1.msra.mxu0 %v245
        %1261 = vmatprep.subr.mxu0 0.0
        %1262 = vmatpush1.msra.mxu0 %v246
        %1263 = vmatprep.subr.mxu0 0.0
        %1264 = vmatpush1.msra.mxu0 %v247
        %1265 = vmatprep.subr.mxu0 0.0
        %1266 = vmatpush1.msra.mxu0 0.0
        %1267 = vmatprep.subr.mxu0 0.0
        %1268 = vmatpush1.msra.mxu0 0.0
        %1269 = vmatprep.subr.mxu0 0.0
        %1270 = vmatpush1.msra.mxu0 0.0
        %1271 = vmatprep.subr.mxu0 0.0
        %1272 = vmatpush1.msra.mxu0 0.0
        %1273 = vmatprep.subr.mxu0 0.0
        %1274 = vmatpush1.msra.mxu0 0.0
        %1275 = vmatprep.subr.mxu0 0.0
        %1276 = vmatpush1.msra.mxu0 0.0
        %1277 = vmatprep.subr.mxu0 0.0
        %1278 = vmatpush1.msra.mxu0 0.0
        %1279 = vmatprep.subr.mxu0 0.0
        %1280 = vmatpush1.msra.mxu0 0.0
        %1281 = vmatprep.subr.mxu0 0.0
        %1282 = vmatpush1.msra.mxu0 0.0
        %1283 = vmatprep.subr.mxu0 0.0
        %1284 = vmatpush1.msra.mxu0 0.0
        %1285 = vmatprep.subr.mxu0 0.0
        %1286 = vmatpush1.msra.mxu0 0.0
        %1287 = vmatprep.subr.mxu0 0.0
        %1288 = vmatpush1.msra.mxu0 0.0
        %1289 = vmatprep.subr.mxu0 0.0
        %1290 = vmatpush1.msra.mxu0 0.0
        %1291 = vmatprep.subr.mxu0 0.0
        %1292 = vmatpush1.msra.mxu0 0.0
        %1293 = vmatprep.subr.mxu0 0.0
        %1294 = vmatpush1.msra.mxu0 0.0
        %1295 = vmatprep.subr.mxu0 0.0
        %1296 = vmatpush1.msra.mxu0 0.0
        %1297 = vmatprep.subr.mxu0 0.0
        %1298 = vmatpush1.msra.mxu0 0.0
        %1299 = vmatprep.subr.mxu0 0.0
        %1300 = vmatpush1.msra.mxu0 0.0
        %1301 = vmatprep.subr.mxu0 0.0
        %1302 = vmatpush1.msra.mxu0 0.0
        %1303 = vmatprep.subr.mxu0 0.0
        %1304 = vmatpush1.msra.mxu0 0.0
        %1305 = vmatprep.subr.mxu0 0.0
        %1306 = vmatpush1.msra.mxu0 0.0
        %1307 = vmatprep.subr.mxu0 0.0
        %1308 = vmatpush1.msra.mxu0 0.0
        %1309 = vmatprep.subr.mxu0 0.0
        %1310 = vmatpush1.msra.mxu0 0.0
        %1311 = vmatprep.subr.mxu0 0.0
        %1312 = vmatpush1.msra.mxu0 0.0
        %1313 = vmatprep.subr.mxu0 0.0
        %1314 = vmatpush1.msra.mxu0 0.0
        %1315 = vmatprep.subr.mxu0 0.0
        %1316 = vmatpush1.msra.mxu0 0.0
        %1317 = vmatprep.subr.mxu0 0.0
        %1318 = vmatpush1.msra.mxu0 0.0
        %1319 = vmatprep.subr.mxu0 0.0
        %1320 = vmatpush1.msra.mxu0 0.0
        %1321 = vmatprep.mubr.f32.mxu0 0.0
        %1322 = vmatmul.mubr.f32.gmra.mrb[0].mxu0 %v1255
        %v1323 = vpop.f32.mrb[0].mxu0
        %v1324 = vadd.f32 0.0, %v1323
        %v1325 = vpop.f32.mrb[0].mxu0
        %1326 = vdwg.mxu0
        %v1327 = vmul.f32 %v973, %v1253
        %v1329 = vsel %vm356, %v1327, 0
        %1331 = vmatprep.subr.mxu0 0.0
        %1332 = vmatpush1.msra.mxu0 %v244
        %1333 = vmatprep.subr.mxu0 0.0
        %1334 = vmatpush1.msra.mxu0 %v245
        %1335 = vmatprep.subr.mxu0 0.0
        %1336 = vmatpush1.msra.mxu0 %v246
        %1337 = vmatprep.subr.mxu0 0.0
        %1338 = vmatpush1.msra.mxu0 %v247
        %1339 = vmatprep.subr.mxu0 0.0
        %1340 = vmatpush1.msra.mxu0 0.0
        %1341 = vmatprep.subr.mxu0 0.0
        %1342 = vmatpush1.msra.mxu0 0.0
        %1343 = vmatprep.subr.mxu0 0.0
        %1344 = vmatpush1.msra.mxu0 0.0
        %1345 = vmatprep.subr.mxu0 0.0
        %1346 = vmatpush1.msra.mxu0 0.0
        %1347 = vmatprep.subr.mxu0 0.0
        %1348 = vmatpush1.msra.mxu0 0.0
        %1349 = vmatprep.subr.mxu0 0.0
        %1350 = vmatpush1.msra.mxu0 0.0
        %1351 = vmatprep.subr.mxu0 0.0
        %1352 = vmatpush1.msra.mxu0 0.0
        %1353 = vmatprep.subr.mxu0 0.0
        %1354 = vmatpush1.msra.mxu0 0.0
        %1355 = vmatprep.subr.mxu0 0.0
        %1356 = vmatpush1.msra.mxu0 0.0
        %1357 = vmatprep.subr.mxu0 0.0
        %1358 = vmatpush1.msra.mxu0 0.0
        %1359 = vmatprep.subr.mxu0 0.0
        %1360 = vmatpush1.msra.mxu0 0.0
        %1361 = vmatprep.subr.mxu0 0.0
        %1362 = vmatpush1.msra.mxu0 0.0
        %1363 = vmatprep.subr.mxu0 0.0
        %1364 = vmatpush1.msra.mxu0 0.0
        %1365 = vmatprep.subr.mxu0 0.0
        %1366 = vmatpush1.msra.mxu0 0.0
        %1367 = vmatprep.subr.mxu0 0.0
        %1368 = vmatpush1.msra.mxu0 0.0
        %1369 = vmatprep.subr.mxu0 0.0
        %1370 = vmatpush1.msra.mxu0 0.0
        %1371 = vmatprep.subr.mxu0 0.0
        %1372 = vmatpush1.msra.mxu0 0.0
        %1373 = vmatprep.subr.mxu0 0.0
        %1374 = vmatpush1.msra.mxu0 0.0
        %1375 = vmatprep.subr.mxu0 0.0
        %1376 = vmatpush1.msra.mxu0 0.0
        %1377 = vmatprep.subr.mxu0 0.0
        %1378 = vmatpush1.msra.mxu0 0.0
        %1379 = vmatprep.subr.mxu0 0.0
        %1380 = vmatpush1.msra.mxu0 0.0
        %1381 = vmatprep.subr.mxu0 0.0
        %1382 = vmatpush1.msra.mxu0 0.0
        %1383 = vmatprep.subr.mxu0 0.0
        %1384 = vmatpush1.msra.mxu0 0.0
        %1385 = vmatprep.subr.mxu0 0.0
        %1386 = vmatpush1.msra.mxu0 0.0
        %1387 = vmatprep.subr.mxu0 0.0
        %1388 = vmatpush1.msra.mxu0 0.0
        %1389 = vmatprep.subr.mxu0 0.0
        %1390 = vmatpush1.msra.mxu0 0.0
        %1391 = vmatprep.subr.mxu0 0.0
        %1392 = vmatpush1.msra.mxu0 0.0
        %1393 = vmatprep.subr.mxu0 0.0
        %1394 = vmatpush1.msra.mxu0 0.0
        %1395 = vmatprep.mubr.f32.mxu0 0.0
        %1396 = vmatmul.mubr.f32.gmra.mrb[0].mxu0 %v1329
        %v1397 = vpop.f32.mrb[0].mxu0
        %v1398 = vadd.f32 0.0, %v1397
        %v1399 = vpop.f32.mrb[0].mxu0
        %1400 = vdwg.mxu0
        %v1401 = vrcp.pop %v1324
        %v1402 = vmul.f32 %v1398, %v1401
        %v1403 = vadd.f32 %v1228, %v1402
        %v1404 = vmul.f32 %v1403, 0.5
        %vm1405 = vcmask 27648
        %1406 = vst.msk [vmem:[%s220] sm:$0xf] %vm1405, %v1404
        %s1407 = sand.u32 %s134, 1
        %s1408 = scalar_lea.sflag [#allocation3], %s1407
        %s1409 = sand.u32 %s134, 1
        %s1410 = smul.addr %s1409, 4
        %s1411 = scalar_lea.vmem [#allocation2], %s1410
        // Predicated region
        $region37: #{tpu_custom_call.1} parent=35 // pred_check
          %p1412 = pneg %p144
        $region38: #{tpu_custom_call.1} parent=35 // pred_check_branch
          %1414 = sbr.rel (%p1412) target = $region40
        $region39: #{tpu_custom_call.1} parent=35 // pred_region
          %s1416 = ssub.s32 64, 64
          %1417 = vsyncadd %s1408, %s1416
          %s1418 = smul.addr %s22, 2
          %s1419 = sadd.s32 %s23, %s1418
          %s1420 = smul.addr %s1419, 64
          %s1421 = scalar_lea.hbm %s4, %s1420
          %s1423 = sshll.u32 %s1411, 4
          %s1424 = int_to_ptr.vmem [resolvable:$true] %s1423
          %1426 = dma.vmem_to_hbm [thread:$0]  %s1424, 64, %s1421, %s1408
        $region40: #{tpu_custom_call.1} parent=35 // pred_fallthru
          _
      $region36: #{tpu_custom_call.1} parent=5 // pred_fallthru
        _
      %p1427 = scmp.le.s32.totalorder 2, %s13
      // Predicated region
      $region41: #{tpu_custom_call.1} parent=5 // pred_check
        %p1428 = pneg %p1427
      $region42: #{tpu_custom_call.1} parent=5 // pred_check_branch
        %1430 = sbr.rel (%p1428) target = $region44
      $region43: #{tpu_custom_call.1} parent=5 // pred_region
        %s1431 = ssub.s32 %s13, 2
        // Predicated region
        $region45: #{tpu_custom_call.1} parent=43 // pred_check
          %p1432 = pneg %p150
        $region46: #{tpu_custom_call.1} parent=43 // pred_check_branch
          %1434 = sbr.rel (%p1432) target = $region48
        $region47: #{tpu_custom_call.1} parent=43 // pred_region
          %s1435 = sand.u32 %s135, 1
          %s1436 = scalar_lea.sflag [#allocation3], %s1435
          %s1437 = sand.u32 %s135, 1
          %s1438 = smul.addr %s1437, 4
          %s1439 = scalar_lea.vmem [#allocation2], %s1438
          %1440 = dma.done %s1436, 64
        $region48: #{tpu_custom_call.1} parent=43 // pred_fallthru
          _
      $region44: #{tpu_custom_call.1} parent=5 // pred_fallthru
        _
    $region6: #{tpu_custom_call.1} parent=1 // loop_footer
      %s17 = sadd.s32 1, %s13
    $region7: #{tpu_custom_call.1} parent=1 // loop_footer_branch
      %12 = sbr.rel target = $region3
    $region8: #{tpu_custom_call.1} parent=1 // loop_exit
      _
    %1441 = vsyncpa [#allocation3], 1
    %s1442 = scalar_lea.sflag [#allocation3], 1
    %1443 = vsyncpa %s1442, 1

</llo_original>
